<compile_context>
chip_gen: v5e
topology: v5e:2x2
jax: 0.10.0
libtpu: 0.0.40
codegen_flags: <defaults>
</compile_context>

<pallas_src>
import functools
from math import exp

import numpy as np
import jax
import jax.numpy as jnp
from jax import lax
from jax.experimental import pallas as pl
from jax.experimental.pallas import tpu as pltpu


# ----------------------------- window setup ------------------------------ #
def _gaussian_1d(window_size: int, sigma: float) -> np.ndarray:
    g = np.array(
        [exp(-((i - window_size // 2) ** 2) / float(2 * sigma ** 2))
         for i in range(window_size)],
        dtype=np.float64,
    )
    return g / g.sum()


def _window_2d(window_size: int) -> np.ndarray:
    g = _gaussian_1d(window_size, 1.5)
    return np.outer(g, g).astype(np.float32)   # (ws, ws), same for all channels


def _round_up(x: int, m: int) -> int:
    return ((x + m - 1) // m) * m


def _detect_num_cores() -> int:
    """2 only for megacore parts (two TensorCores behind one device)."""
    try:
        kind = jax.devices()[0].device_kind.lower()
    except Exception:
        return 1
    if "v7" in kind or "v4" in kind:
        return 2
    if "v5" in kind and "lite" not in kind and "v5e" not in kind:
        return 2                                   # v5p megacore
    return 1


# ------------------------------ Pallas kernel ---------------------------- #
def _ssim_kernel(x1_ref, x2_ref, out_ref, *, w_flat, c1, c2,
                 chunk_rows, total_valid):
    """x*_ref: (K, tile_r, 128) blocks.  out_ref: (1, 8, 128) per-core acc."""
    core = pl.program_id(0)
    step = pl.program_id(1)
    steps_per_core = pl.num_programs(1)
    tile_r = x1_ref.shape[1]
    n_chunks = tile_r // chunk_rows

    @pl.when(step == 0)
    def _():
        out_ref[...] = jnp.zeros_like(out_ref)

    # Flat element index of the first element of this tile.
    tile_elem0 = (core * steps_per_core + step) * tile_r * 128

    # Element offsets within one chunk (hoisted out of the chunk loop; JAX
    # does not CSE broadcasts).
    chunk_iota = (
        lax.broadcasted_iota(jnp.int32, (chunk_rows, 128), 0) * 128
        + lax.broadcasted_iota(jnp.int32, (chunk_rows, 128), 1))

    def chunk_body(ci, acc):
        r0 = pl.multiple_of(ci * chunk_rows, chunk_rows)

        # Chunk-local accumulators: (chunk_rows, 128) f32 values that live in
        # vregs across the unrolled tap loop (no accumulator VMEM stores).
        mu1 = jnp.zeros((chunk_rows, 128), jnp.float32)
        mu2 = jnp.zeros((chunk_rows, 128), jnp.float32)
        e11 = jnp.zeros((chunk_rows, 128), jnp.float32)
        e22 = jnp.zeros((chunk_rows, 128), jnp.float32)
        e12 = jnp.zeros((chunk_rows, 128), jnp.float32)

        # Unrolled taps; Gaussian weights are Python-float immediates.
        # 10 VALU ops / tap / element (s1, s2 reused for the moments).
        for k, wk in enumerate(w_flat):
            t1 = x1_ref[k, pl.ds(r0, chunk_rows), :].astype(jnp.float32)
            t2 = x2_ref[k, pl.ds(r0, chunk_rows), :].astype(jnp.float32)
            s1 = wk * t1
            s2 = wk * t2
            mu1 = mu1 + s1
            mu2 = mu2 + s2
            e11 = e11 + s1 * t1
            e22 = e22 + s2 * t2
            e12 = e12 + s1 * t2

        mu1_sq = mu1 * mu1
        mu2_sq = mu2 * mu2
        mu12 = mu1 * mu2
        sigma1_sq = e11 - mu1_sq
        sigma2_sq = e22 - mu2_sq
        sigma12 = e12 - mu12

        num = (2.0 * mu12 + c1) * (2.0 * sigma12 + c2)
        den = (mu1_sq + mu2_sq + c1) * (sigma1_sq + sigma2_sq + c2)
        # EUP approximate reciprocal + one Newton step (rel. err ~ eps^2):
        # keeps the divide's refinement work mostly off the VALU.
        r = pl.reciprocal(den, approx=True)
        r = r * (2.0 - den * r)
        ssim = num * r

        # Mask out zero-padded flat elements in-kernel (no wrapper-side
        # correction, no c1/c2 > 0 assumption, NaNs in pad lanes discarded).
        thresh = total_valid - (tile_elem0 + r0 * 128)
        ssim = jnp.where(chunk_iota < thresh, ssim, 0.0)

        # Pure-VPU partial reduce of the chunk into an (8, 128) slab (1 vreg).
        return acc + ssim.reshape(-1, 8, 128).sum(axis=0)

    acc = lax.fori_loop(0, n_chunks, chunk_body,
                        jnp.zeros((8, 128), jnp.float32), unroll=True)
    out_ref[...] += acc[None, :, :]


# ------------------------------ wrapper ----------------------------------- #
def _extract_taps(img, *, window_size, stride, pad, H_out, W_out, tap_dtype):
    """Return a (K, M) tap-major array; tap k = (di, dj) window offset."""
    B, C, _, _ = img.shape
    x = img.astype(tap_dtype)
    xp = jnp.pad(x, ((0, 0), (0, 0), (pad, pad), (pad, pad)))
    if stride == window_size:
        # Taps are an exact partition of the (cropped) padded image:
        # one reshape + one transpose, fused by XLA into a single copy.
        # TODO(synk): a fully in-kernel gather (padded image passed straight
        # into pallas_call) would drop this remaining tap-array HBM pass too.
        xp = xp[:, :, :window_size * H_out, :window_size * W_out]
        xp = xp.reshape(B, C, H_out, window_size, W_out, window_size)
        xp = jnp.transpose(xp, (3, 5, 0, 1, 2, 4))
        return xp.reshape(window_size * window_size, -1)
    # TODO(synk): general-stride (overlapping-window) path still materializes
    # K strided slices; an in-kernel gather would avoid ~K x HBM traffic.
    taps = []
    for di in range(window_size):
        for dj in range(window_size):
            t = lax.slice(
                xp, (0, 0, di, dj),
                (B, C,
                 di + stride * (H_out - 1) + 1,
                 dj + stride * (W_out - 1) + 1),
                (1, 1, stride, stride))
            taps.append(t.reshape(-1))
    return jnp.stack(taps, axis=0)


def ssim_pallas(img1, img2, *, window_size=3, stride=3, channel=3,
                size_average=True, c1=0.01 ** 2, c2=0.03 ** 2,
                max_tile_rows=1024, chunk_rows=64, num_cores=None,
                tap_dtype=None):
    """img1, img2: [B, C, H, W] (NCHW, matching the PyTorch module)."""
    B, C, H, W = img1.shape
    assert C == channel, f"expected {channel} channels, got {C}"
    if stride is None:
        stride = 1
    pad = (window_size - 1) // 2

    H_out = (H + 2 * pad - window_size) // stride + 1
    W_out = (W + 2 * pad - window_size) // stride + 1
    K = window_size * window_size
    M = B * C * H_out * W_out                  # number of real output pixels

    if num_cores is None:
        num_cores = _detect_num_cores()
    if tap_dtype is None:
        # Keep the input dtype through HBM (bf16 inputs stay bf16: halves
        # traffic on a memory-bound kernel).  Pass tap_dtype=jnp.bfloat16 to
        # down-convert f32 inputs; validate accuracy first (sigma = E[x^2] -
        # mu^2 is cancellation-prone in low precision).
        tap_dtype = (img1.dtype if jnp.issubdtype(img1.dtype, jnp.floating)
                     else jnp.float32)

    # Lane-dense tiling: flatten output pixels onto a (rows, 128) grid padded
    # so the rows split evenly over num_cores x steps x tile_r.
    chunk_rows = _round_up(max(8, min(chunk_rows, max_tile_rows)), 8)
    R = max(1, -(-M // 128))
    tile_r = min(_round_up(max_tile_rows, chunk_rows),
                 _round_up(max(1, -(-R // num_cores)), chunk_rows))
    R_pad = _round_up(R, num_cores * tile_r)
    M_pad = R_pad * 128
    steps_per_core = R_pad // (num_cores * tile_r)

    def to_blocks(img):
        t = _extract_taps(img, window_size=window_size, stride=stride,
                          pad=pad, H_out=H_out, W_out=W_out,
                          tap_dtype=tap_dtype)
        t = jnp.pad(t, ((0, 0), (0, M_pad - M)))   # fused with the tap copy
        return t.reshape(K, R_pad, 128)

    x1 = to_blocks(img1)
    x2 = to_blocks(img2)

    # f32 Gaussian weights baked as Python-float immediates (exactly matches
    # the reference f32 window; nothing is captured as a kernel constant).
    w_flat = tuple(float(v) for v in _window_2d(window_size).reshape(-1))

    kernel = functools.partial(
        _ssim_kernel, w_flat=w_flat, c1=float(c1), c2=float(c2),
        chunk_rows=chunk_rows, total_valid=M)

    # VMEM budget: 2 inputs x 2 pipeline buffers x (K, tile_r, 128) blocks
    # plus slack; explicit so v5e's 16 MiB scoped default doesn't bite and
    # the cap stays well inside v7x's 64 MiB physical VMEM.
    block_bytes = K * tile_r * 128 * jnp.dtype(tap_dtype).itemsize
    vmem_limit = int(min(max(4 * block_bytes + (8 << 20), 32 << 20), 56 << 20))

    partials = pl.pallas_call(
        kernel,
        out_shape=jax.ShapeDtypeStruct((num_cores, 8, 128), jnp.float32),
        grid=(num_cores, steps_per_core),
        in_specs=[
            pl.BlockSpec((K, tile_r, 128),
                         lambda c, s: (0, c * steps_per_core + s, 0)),
            pl.BlockSpec((K, tile_r, 128),
                         lambda c, s: (0, c * steps_per_core + s, 0)),
        ],
        out_specs=pl.BlockSpec((1, 8, 128), lambda c, s: (c, 0, 0)),
        compiler_params=pltpu.CompilerParams(
            dimension_semantics=("parallel", "arbitrary"),
            vmem_limit_bytes=vmem_limit),
    )(x1, x2)

    total = jnp.sum(partials)
    if size_average:
        return total / jnp.float32(M)
    # TODO(synk): size_average=False (per-image mean over C,H,W) needs
    # per-batch partial sums from the kernel; not implemented.
    raise NotImplementedError("size_average=False not implemented")


# ------------------------- pure-JAX reference ----------------------------- #
def ssim_reference(img1, img2, *, window_size=3, stride=3, channel=3,
                   c1=0.01 ** 2, c2=0.03 ** 2):
    w2d = jnp.asarray(_window_2d(window_size))
    w = jnp.broadcast_to(w2d, (channel, 1, window_size, window_size))
    pad = (window_size - 1) // 2

    def conv(x):
        return lax.conv_general_dilated(
            x.astype(jnp.float32), w,
            window_strides=(stride, stride),
            padding=((pad, pad), (pad, pad)),
            dimension_numbers=("NCHW", "OIHW", "NCHW"),
            feature_group_count=channel)

    mu1, mu2 = conv(img1), conv(img2)
    mu1_sq, mu2_sq, mu12 = mu1 * mu1, mu2 * mu2, mu1 * mu2
    s1 = conv(img1 * img1) - mu1_sq
    s2 = conv(img2 * img2) - mu2_sq
    s12 = conv(img1 * img2) - mu12
    m = ((2 * mu12 + c1) * (2 * s12 + c2)) / (
        (mu1_sq + mu2_sq + c1) * (s1 + s2 + c2))
    return jnp.mean(m)


# --------------------------------- main ----------------------------------- #
if __name__ == "__main__":
    key = jax.random.PRNGKey(0)
    k1, k2 = jax.random.split(key)
    B, C, H, W = 2, 3, 16, 16          # module default channel=3
    img1 = jax.random.uniform(k1, (B, C, H, W), dtype=jnp.float32)
    img2 = jax.random.uniform(k2, (B, C, H, W), dtype=jnp.float32)

    ssim_fn = jax.jit(functools.partial(
        ssim_pallas, window_size=3, stride=3, channel=3, size_average=True))
    out = jax.block_until_ready(ssim_fn(img1, img2))

    ref = jax.block_until_ready(ssim_reference(img1, img2))
    assert jnp.allclose(out, ref, rtol=2e-4, atol=2e-5), (float(out), float(ref))

    print("KERNEL_OK")
</pallas_src>

<mosaic_0001>
module attributes {stable_mosaic.version = 11 : i64} {
  func.func @_ssim_kernel(%arg0: i32, %arg1: i32, %arg2: memref<9x64x128xf32, #tpu.memory_space<vmem>>, %arg3: memref<9x64x128xf32, #tpu.memory_space<vmem>>, %arg4: memref<1x8x128xf32, #tpu.memory_space<vmem>>) attributes {dimension_semantics = [#tpu.dimension_semantics<parallel>, #tpu.dimension_semantics<arbitrary>], iteration_bounds = array<i64: 1, 1>, scalar_prefetch = 0 : i64, scratch_operands = 0 : i64, tpu.core_type = #tpu.core_type<tc>, window_params = [{transform_indices = @transform_0, window_bounds = array<i64: 9, 64, 128>}, {transform_indices = @transform_1, window_bounds = array<i64: 9, 64, 128>}, {transform_indices = @transform_2, window_bounds = array<i64: 1, 8, 128>}]} {
    %c0_i32 = arith.constant 0 : i32
    %0 = arith.cmpi eq, %arg1, %c0_i32 : i32
    %1 = arith.extui %0 : i1 to i32
    %c0_i32_0 = arith.constant 0 : i32
    %2 = arith.cmpi ne, %1, %c0_i32_0 : i32
    scf.if %2 {
      %cst_71 = arith.constant 0.000000e+00 : f32
      %224 = vector.broadcast %cst_71 : f32 to vector<1x8x128xf32>
      %c0_72 = arith.constant 0 : index
      %c0_73 = arith.constant 0 : index
      %c0_74 = arith.constant 0 : index
      %225 = vector.load %arg4[%c0_72, %c0_73, %c0_74] : memref<1x8x128xf32, #tpu.memory_space<vmem>>, vector<1x8x128xf32>
      tpu.vector_store %arg4[%c0_72, %c0_73, %c0_74], %224 {strides = array<i32>} : memref<1x8x128xf32, #tpu.memory_space<vmem>>, vector<1x8x128xf32>,
    } else {
    }
    %c1_i32 = arith.constant 1 : i32
    %3 = arith.muli %arg0, %c1_i32 : i32
    %4 = arith.addi %3, %arg1 : i32
    %c64_i32 = arith.constant 64 : i32
    %5 = arith.muli %4, %c64_i32 : i32
    %c128_i32 = arith.constant 128 : i32
    %6 = arith.muli %5, %c128_i32 : i32
    %7 = tpu.iota {dimensions = array<i32: 0>} : vector<64x128xi32>
    %c128_i32_1 = arith.constant 128 : i32
    %8 = vector.broadcast %c128_i32_1 : i32 to vector<64x128xi32>
    %9 = arith.muli %7, %8 : vector<64x128xi32>
    %10 = tpu.iota {dimensions = array<i32: 1>} : vector<64x128xi32>
    %11 = arith.addi %9, %10 : vector<64x128xi32>
    %cst = arith.constant 0.000000e+00 : f32
    %12 = vector.broadcast %cst : f32 to vector<8x128xf32>
    %c0_i32_2 = arith.constant 0 : i32
    %c64_i32_3 = arith.constant 64 : i32
    %13 = arith.muli %c0_i32_2, %c64_i32_3 : i32
    %14 = tpu.assume_multiple %13, 64 : i32
    %cst_4 = arith.constant 0.000000e+00 : f32
    %15 = vector.broadcast %cst_4 : f32 to vector<64x128xf32>
    %cst_5 = arith.constant 0.000000e+00 : f32
    %16 = vector.broadcast %cst_5 : f32 to vector<64x128xf32>
    %cst_6 = arith.constant 0.000000e+00 : f32
    %17 = vector.broadcast %cst_6 : f32 to vector<64x128xf32>
    %cst_7 = arith.constant 0.000000e+00 : f32
    %18 = vector.broadcast %cst_7 : f32 to vector<64x128xf32>
    %cst_8 = arith.constant 0.000000e+00 : f32
    %19 = vector.broadcast %cst_8 : f32 to vector<64x128xf32>
    %c0 = arith.constant 0 : index
    %20 = arith.index_cast %14 : i32 to index
    %c0_9 = arith.constant 0 : index
    %21 = vector.load %arg2[%c0, %20, %c0_9] : memref<9x64x128xf32, #tpu.memory_space<vmem>>, vector<1x64x128xf32>
    %22 = vector.shape_cast %21 : vector<1x64x128xf32> to vector<64x128xf32>
    %c0_10 = arith.constant 0 : index
    %23 = arith.index_cast %14 : i32 to index
    %c0_11 = arith.constant 0 : index
    %24 = vector.load %arg3[%c0_10, %23, %c0_11] : memref<9x64x128xf32, #tpu.memory_space<vmem>>, vector<1x64x128xf32>
    %25 = vector.shape_cast %24 : vector<1x64x128xf32> to vector<64x128xf32>
    %cst_12 = arith.constant 0.0947416574 : f32
    %26 = vector.broadcast %cst_12 : f32 to vector<64x128xf32>
    %27 = arith.mulf %26, %22 : vector<64x128xf32>
    %cst_13 = arith.constant 0.0947416574 : f32
    %28 = vector.broadcast %cst_13 : f32 to vector<64x128xf32>
    %29 = arith.mulf %28, %25 : vector<64x128xf32>
    %30 = arith.addf %15, %27 : vector<64x128xf32>
    %31 = arith.addf %16, %29 : vector<64x128xf32>
    %32 = arith.mulf %27, %22 : vector<64x128xf32>
    %33 = arith.addf %17, %32 : vector<64x128xf32>
    %34 = arith.mulf %29, %25 : vector<64x128xf32>
    %35 = arith.addf %18, %34 : vector<64x128xf32>
    %36 = arith.mulf %27, %25 : vector<64x128xf32>
    %37 = arith.addf %19, %36 : vector<64x128xf32>
    %c1 = arith.constant 1 : index
    %38 = arith.index_cast %14 : i32 to index
    %c0_14 = arith.constant 0 : index
    %39 = vector.load %arg2[%c1, %38, %c0_14] : memref<9x64x128xf32, #tpu.memory_space<vmem>>, vector<1x64x128xf32>
    %40 = vector.shape_cast %39 : vector<1x64x128xf32> to vector<64x128xf32>
    %c1_15 = arith.constant 1 : index
    %41 = arith.index_cast %14 : i32 to index
    %c0_16 = arith.constant 0 : index
    %42 = vector.load %arg3[%c1_15, %41, %c0_16] : memref<9x64x128xf32, #tpu.memory_space<vmem>>, vector<1x64x128xf32>
    %43 = vector.shape_cast %42 : vector<1x64x128xf32> to vector<64x128xf32>
    %cst_17 = arith.constant 0.118318014 : f32
    %44 = vector.broadcast %cst_17 : f32 to vector<64x128xf32>
    %45 = arith.mulf %44, %40 : vector<64x128xf32>
    %cst_18 = arith.constant 0.118318014 : f32
    %46 = vector.broadcast %cst_18 : f32 to vector<64x128xf32>
    %47 = arith.mulf %46, %43 : vector<64x128xf32>
    %48 = arith.addf %30, %45 : vector<64x128xf32>
    %49 = arith.addf %31, %47 : vector<64x128xf32>
    %50 = arith.mulf %45, %40 : vector<64x128xf32>
    %51 = arith.addf %33, %50 : vector<64x128xf32>
    %52 = arith.mulf %47, %43 : vector<64x128xf32>
    %53 = arith.addf %35, %52 : vector<64x128xf32>
    %54 = arith.mulf %45, %43 : vector<64x128xf32>
    %55 = arith.addf %37, %54 : vector<64x128xf32>
    %c2 = arith.constant 2 : index
    %56 = arith.index_cast %14 : i32 to index
    %c0_19 = arith.constant 0 : index
    %57 = vector.load %arg2[%c2, %56, %c0_19] : memref<9x64x128xf32, #tpu.memory_space<vmem>>, vector<1x64x128xf32>
    %58 = vector.shape_cast %57 : vector<1x64x128xf32> to vector<64x128xf32>
    %c2_20 = arith.constant 2 : index
    %59 = arith.index_cast %14 : i32 to index
    %c0_21 = arith.constant 0 : index
    %60 = vector.load %arg3[%c2_20, %59, %c0_21] : memref<9x64x128xf32, #tpu.memory_space<vmem>>, vector<1x64x128xf32>
    %61 = vector.shape_cast %60 : vector<1x64x128xf32> to vector<64x128xf32>
    %cst_22 = arith.constant 0.0947416574 : f32
    %62 = vector.broadcast %cst_22 : f32 to vector<64x128xf32>
    %63 = arith.mulf %62, %58 : vector<64x128xf32>
    %cst_23 = arith.constant 0.0947416574 : f32
    %64 = vector.broadcast %cst_23 : f32 to vector<64x128xf32>
    %65 = arith.mulf %64, %61 : vector<64x128xf32>
    %66 = arith.addf %48, %63 : vector<64x128xf32>
    %67 = arith.addf %49, %65 : vector<64x128xf32>
    %68 = arith.mulf %63, %58 : vector<64x128xf32>
    %69 = arith.addf %51, %68 : vector<64x128xf32>
    %70 = arith.mulf %65, %61 : vector<64x128xf32>
    %71 = arith.addf %53, %70 : vector<64x128xf32>
    %72 = arith.mulf %63, %61 : vector<64x128xf32>
    %73 = arith.addf %55, %72 : vector<64x128xf32>
    %c3 = arith.constant 3 : index
    %74 = arith.index_cast %14 : i32 to index
    %c0_24 = arith.constant 0 : index
    %75 = vector.load %arg2[%c3, %74, %c0_24] : memref<9x64x128xf32, #tpu.memory_space<vmem>>, vector<1x64x128xf32>
    %76 = vector.shape_cast %75 : vector<1x64x128xf32> to vector<64x128xf32>
    %c3_25 = arith.constant 3 : index
    %77 = arith.index_cast %14 : i32 to index
    %c0_26 = arith.constant 0 : index
    %78 = vector.load %arg3[%c3_25, %77, %c0_26] : memref<9x64x128xf32, #tpu.memory_space<vmem>>, vector<1x64x128xf32>
    %79 = vector.shape_cast %78 : vector<1x64x128xf32> to vector<64x128xf32>
    %cst_27 = arith.constant 0.118318014 : f32
    %80 = vector.broadcast %cst_27 : f32 to vector<64x128xf32>
    %81 = arith.mulf %80, %76 : vector<64x128xf32>
    %cst_28 = arith.constant 0.118318014 : f32
    %82 = vector.broadcast %cst_28 : f32 to vector<64x128xf32>
    %83 = arith.mulf %82, %79 : vector<64x128xf32>
    %84 = arith.addf %66, %81 : vector<64x128xf32>
    %85 = arith.addf %67, %83 : vector<64x128xf32>
    %86 = arith.mulf %81, %76 : vector<64x128xf32>
    %87 = arith.addf %69, %86 : vector<64x128xf32>
    %88 = arith.mulf %83, %79 : vector<64x128xf32>
    %89 = arith.addf %71, %88 : vector<64x128xf32>
    %90 = arith.mulf %81, %79 : vector<64x128xf32>
    %91 = arith.addf %73, %90 : vector<64x128xf32>
    %c4 = arith.constant 4 : index
    %92 = arith.index_cast %14 : i32 to index
    %c0_29 = arith.constant 0 : index
    %93 = vector.load %arg2[%c4, %92, %c0_29] : memref<9x64x128xf32, #tpu.memory_space<vmem>>, vector<1x64x128xf32>
    %94 = vector.shape_cast %93 : vector<1x64x128xf32> to vector<64x128xf32>
    %c4_30 = arith.constant 4 : index
    %95 = arith.index_cast %14 : i32 to index
    %c0_31 = arith.constant 0 : index
    %96 = vector.load %arg3[%c4_30, %95, %c0_31] : memref<9x64x128xf32, #tpu.memory_space<vmem>>, vector<1x64x128xf32>
    %97 = vector.shape_cast %96 : vector<1x64x128xf32> to vector<64x128xf32>
    %cst_32 = arith.constant 0.147761315 : f32
    %98 = vector.broadcast %cst_32 : f32 to vector<64x128xf32>
    %99 = arith.mulf %98, %94 : vector<64x128xf32>
    %cst_33 = arith.constant 0.147761315 : f32
    %100 = vector.broadcast %cst_33 : f32 to vector<64x128xf32>
    %101 = arith.mulf %100, %97 : vector<64x128xf32>
    %102 = arith.addf %84, %99 : vector<64x128xf32>
    %103 = arith.addf %85, %101 : vector<64x128xf32>
    %104 = arith.mulf %99, %94 : vector<64x128xf32>
    %105 = arith.addf %87, %104 : vector<64x128xf32>
    %106 = arith.mulf %101, %97 : vector<64x128xf32>
    %107 = arith.addf %89, %106 : vector<64x128xf32>
    %108 = arith.mulf %99, %97 : vector<64x128xf32>
    %109 = arith.addf %91, %108 : vector<64x128xf32>
    %c5 = arith.constant 5 : index
    %110 = arith.index_cast %14 : i32 to index
    %c0_34 = arith.constant 0 : index
    %111 = vector.load %arg2[%c5, %110, %c0_34] : memref<9x64x128xf32, #tpu.memory_space<vmem>>, vector<1x64x128xf32>
    %112 = vector.shape_cast %111 : vector<1x64x128xf32> to vector<64x128xf32>
    %c5_35 = arith.constant 5 : index
    %113 = arith.index_cast %14 : i32 to index
    %c0_36 = arith.constant 0 : index
    %114 = vector.load %arg3[%c5_35, %113, %c0_36] : memref<9x64x128xf32, #tpu.memory_space<vmem>>, vector<1x64x128xf32>
    %115 = vector.shape_cast %114 : vector<1x64x128xf32> to vector<64x128xf32>
    %cst_37 = arith.constant 0.118318014 : f32
    %116 = vector.broadcast %cst_37 : f32 to vector<64x128xf32>
    %117 = arith.mulf %116, %112 : vector<64x128xf32>
    %cst_38 = arith.constant 0.118318014 : f32
    %118 = vector.broadcast %cst_38 : f32 to vector<64x128xf32>
    %119 = arith.mulf %118, %115 : vector<64x128xf32>
    %120 = arith.addf %102, %117 : vector<64x128xf32>
    %121 = arith.addf %103, %119 : vector<64x128xf32>
    %122 = arith.mulf %117, %112 : vector<64x128xf32>
    %123 = arith.addf %105, %122 : vector<64x128xf32>
    %124 = arith.mulf %119, %115 : vector<64x128xf32>
    %125 = arith.addf %107, %124 : vector<64x128xf32>
    %126 = arith.mulf %117, %115 : vector<64x128xf32>
    %127 = arith.addf %109, %126 : vector<64x128xf32>
    %c6 = arith.constant 6 : index
    %128 = arith.index_cast %14 : i32 to index
    %c0_39 = arith.constant 0 : index
    %129 = vector.load %arg2[%c6, %128, %c0_39] : memref<9x64x128xf32, #tpu.memory_space<vmem>>, vector<1x64x128xf32>
    %130 = vector.shape_cast %129 : vector<1x64x128xf32> to vector<64x128xf32>
    %c6_40 = arith.constant 6 : index
    %131 = arith.index_cast %14 : i32 to index
    %c0_41 = arith.constant 0 : index
    %132 = vector.load %arg3[%c6_40, %131, %c0_41] : memref<9x64x128xf32, #tpu.memory_space<vmem>>, vector<1x64x128xf32>
    %133 = vector.shape_cast %132 : vector<1x64x128xf32> to vector<64x128xf32>
    %cst_42 = arith.constant 0.0947416574 : f32
    %134 = vector.broadcast %cst_42 : f32 to vector<64x128xf32>
    %135 = arith.mulf %134, %130 : vector<64x128xf32>
    %cst_43 = arith.constant 0.0947416574 : f32
    %136 = vector.broadcast %cst_43 : f32 to vector<64x128xf32>
    %137 = arith.mulf %136, %133 : vector<64x128xf32>
    %138 = arith.addf %120, %135 : vector<64x128xf32>
    %139 = arith.addf %121, %137 : vector<64x128xf32>
    %140 = arith.mulf %135, %130 : vector<64x128xf32>
    %141 = arith.addf %123, %140 : vector<64x128xf32>
    %142 = arith.mulf %137, %133 : vector<64x128xf32>
    %143 = arith.addf %125, %142 : vector<64x128xf32>
    %144 = arith.mulf %135, %133 : vector<64x128xf32>
    %145 = arith.addf %127, %144 : vector<64x128xf32>
    %c7 = arith.constant 7 : index
    %146 = arith.index_cast %14 : i32 to index
    %c0_44 = arith.constant 0 : index
    %147 = vector.load %arg2[%c7, %146, %c0_44] : memref<9x64x128xf32, #tpu.memory_space<vmem>>, vector<1x64x128xf32>
    %148 = vector.shape_cast %147 : vector<1x64x128xf32> to vector<64x128xf32>
    %c7_45 = arith.constant 7 : index
    %149 = arith.index_cast %14 : i32 to index
    %c0_46 = arith.constant 0 : index
    %150 = vector.load %arg3[%c7_45, %149, %c0_46] : memref<9x64x128xf32, #tpu.memory_space<vmem>>, vector<1x64x128xf32>
    %151 = vector.shape_cast %150 : vector<1x64x128xf32> to vector<64x128xf32>
    %cst_47 = arith.constant 0.118318014 : f32
    %152 = vector.broadcast %cst_47 : f32 to vector<64x128xf32>
    %153 = arith.mulf %152, %148 : vector<64x128xf32>
    %cst_48 = arith.constant 0.118318014 : f32
    %154 = vector.broadcast %cst_48 : f32 to vector<64x128xf32>
    %155 = arith.mulf %154, %151 : vector<64x128xf32>
    %156 = arith.addf %138, %153 : vector<64x128xf32>
    %157 = arith.addf %139, %155 : vector<64x128xf32>
    %158 = arith.mulf %153, %148 : vector<64x128xf32>
    %159 = arith.addf %141, %158 : vector<64x128xf32>
    %160 = arith.mulf %155, %151 : vector<64x128xf32>
    %161 = arith.addf %143, %160 : vector<64x128xf32>
    %162 = arith.mulf %153, %151 : vector<64x128xf32>
    %163 = arith.addf %145, %162 : vector<64x128xf32>
    %c8 = arith.constant 8 : index
    %164 = arith.index_cast %14 : i32 to index
    %c0_49 = arith.constant 0 : index
    %165 = vector.load %arg2[%c8, %164, %c0_49] : memref<9x64x128xf32, #tpu.memory_space<vmem>>, vector<1x64x128xf32>
    %166 = vector.shape_cast %165 : vector<1x64x128xf32> to vector<64x128xf32>
    %c8_50 = arith.constant 8 : index
    %167 = arith.index_cast %14 : i32 to index
    %c0_51 = arith.constant 0 : index
    %168 = vector.load %arg3[%c8_50, %167, %c0_51] : memref<9x64x128xf32, #tpu.memory_space<vmem>>, vector<1x64x128xf32>
    %169 = vector.shape_cast %168 : vector<1x64x128xf32> to vector<64x128xf32>
    %cst_52 = arith.constant 0.0947416574 : f32
    %170 = vector.broadcast %cst_52 : f32 to vector<64x128xf32>
    %171 = arith.mulf %170, %166 : vector<64x128xf32>
    %cst_53 = arith.constant 0.0947416574 : f32
    %172 = vector.broadcast %cst_53 : f32 to vector<64x128xf32>
    %173 = arith.mulf %172, %169 : vector<64x128xf32>
    %174 = arith.addf %156, %171 : vector<64x128xf32>
    %175 = arith.addf %157, %173 : vector<64x128xf32>
    %176 = arith.mulf %171, %166 : vector<64x128xf32>
    %177 = arith.addf %159, %176 : vector<64x128xf32>
    %178 = arith.mulf %173, %169 : vector<64x128xf32>
    %179 = arith.addf %161, %178 : vector<64x128xf32>
    %180 = arith.mulf %171, %169 : vector<64x128xf32>
    %181 = arith.addf %163, %180 : vector<64x128xf32>
    %182 = arith.mulf %174, %174 : vector<64x128xf32>
    %183 = arith.mulf %175, %175 : vector<64x128xf32>
    %184 = arith.mulf %174, %175 : vector<64x128xf32>
    %185 = arith.subf %177, %182 : vector<64x128xf32>
    %186 = arith.subf %179, %183 : vector<64x128xf32>
    %187 = arith.subf %181, %184 : vector<64x128xf32>
    %cst_54 = arith.constant 2.000000e+00 : f32
    %188 = vector.broadcast %cst_54 : f32 to vector<64x128xf32>
    %189 = arith.mulf %188, %184 : vector<64x128xf32>
    %cst_55 = arith.constant 9.99999974E-5 : f32
    %190 = vector.broadcast %cst_55 : f32 to vector<64x128xf32>
    %191 = arith.addf %189, %190 : vector<64x128xf32>
    %cst_56 = arith.constant 2.000000e+00 : f32
    %192 = vector.broadcast %cst_56 : f32 to vector<64x128xf32>
    %193 = arith.mulf %192, %187 : vector<64x128xf32>
    %cst_57 = arith.constant 8.99999984E-4 : f32
    %194 = vector.broadcast %cst_57 : f32 to vector<64x128xf32>
    %195 = arith.addf %193, %194 : vector<64x128xf32>
    %196 = arith.mulf %191, %195 : vector<64x128xf32>
    %197 = arith.addf %182, %183 : vector<64x128xf32>
    %cst_58 = arith.constant 9.99999974E-5 : f32
    %198 = vector.broadcast %cst_58 : f32 to vector<64x128xf32>
    %199 = arith.addf %197, %198 : vector<64x128xf32>
    %200 = arith.addf %185, %186 : vector<64x128xf32>
    %cst_59 = arith.constant 8.99999984E-4 : f32
    %201 = vector.broadcast %cst_59 : f32 to vector<64x128xf32>
    %202 = arith.addf %200, %201 : vector<64x128xf32>
    %203 = arith.mulf %199, %202 : vector<64x128xf32>
    %204 = tpu.reciprocal %203 {approx = true} : vector<64x128xf32> -> vector<64x128xf32>
    %205 = arith.mulf %203, %204 : vector<64x128xf32>
    %cst_60 = arith.constant 2.000000e+00 : f32
    %206 = vector.broadcast %cst_60 : f32 to vector<64x128xf32>
    %207 = arith.subf %206, %205 : vector<64x128xf32>
    %208 = arith.mulf %204, %207 : vector<64x128xf32>
    %209 = arith.mulf %196, %208 : vector<64x128xf32>
    %c128_i32_61 = arith.constant 128 : i32
    %210 = arith.muli %14, %c128_i32_61 : i32
    %211 = arith.addi %6, %210 : i32
    %c216_i32 = arith.constant 216 : i32
    %212 = arith.subi %c216_i32, %211 : i32
    %213 = vector.broadcast %212 : i32 to vector<64x128xi32>
    %214 = arith.cmpi slt, %11, %213 : vector<64x128xi32>
    %cst_62 = arith.constant 0.000000e+00 : f32
    %215 = vector.broadcast %cst_62 : f32 to vector<64x128xf32>
    %216 = arith.select %214, %209, %215 : vector<64x128xi1>, vector<64x128xf32>
    %217 = vector.shape_cast %216 : vector<64x128xf32> to vector<8x8x128xf32>
    %cst_63 = arith.constant dense<0.000000e+00> : vector<8x128xf32>
    %218 = vector.multi_reduction <add>, %217, %cst_63 [0] : vector<8x8x128xf32> to vector<8x128xf32>
    %219 = arith.addf %12, %218 : vector<8x128xf32>
    %c1_i32_64 = arith.constant 1 : i32
    %c0_65 = arith.constant 0 : index
    %c0_66 = arith.constant 0 : index
    %c0_67 = arith.constant 0 : index
    %220 = vector.load %arg4[%c0_65, %c0_66, %c0_67] : memref<1x8x128xf32, #tpu.memory_space<vmem>>, vector<1x8x128xf32>
    %221 = vector.shape_cast %219 : vector<8x128xf32> to vector<1x8x128xf32>
    %222 = arith.addf %220, %221 : vector<1x8x128xf32>
    %c0_68 = arith.constant 0 : index
    %c0_69 = arith.constant 0 : index
    %c0_70 = arith.constant 0 : index
    %223 = vector.load %arg4[%c0_68, %c0_69, %c0_70] : memref<1x8x128xf32, #tpu.memory_space<vmem>>, vector<1x8x128xf32>
    tpu.vector_store %arg4[%c0_68, %c0_69, %c0_70], %222 {strides = array<i32>} : memref<1x8x128xf32, #tpu.memory_space<vmem>>, vector<1x8x128xf32>,
    return
  }
  func.func @transform_0(%arg0: i32, %arg1: i32) -> (i32, i32, i32) {
    %c1_i32 = arith.constant 1 : i32
    %0 = arith.muli %arg0, %c1_i32 : i32
    %1 = arith.addi %0, %arg1 : i32
    %c0_i32 = arith.constant 0 : i32
    %c0_i32_0 = arith.constant 0 : i32
    %c0_i32_1 = arith.constant 0 : i32
    return %c0_i32, %1, %c0_i32_0 : i32, i32, i32
  }
  func.func @transform_1(%arg0: i32, %arg1: i32) -> (i32, i32, i32) {
    %c1_i32 = arith.constant 1 : i32
    %0 = arith.muli %arg0, %c1_i32 : i32
    %1 = arith.addi %0, %arg1 : i32
    %c0_i32 = arith.constant 0 : i32
    %c0_i32_0 = arith.constant 0 : i32
    %c0_i32_1 = arith.constant 0 : i32
    return %c0_i32, %1, %c0_i32_0 : i32, i32, i32
  }
  func.func @transform_2(%arg0: i32, %arg1: i32) -> (i32, i32, i32) {
    %c0_i32 = arith.constant 0 : i32
    %c0_i32_0 = arith.constant 0 : i32
    %c0_i32_1 = arith.constant 0 : i32
    return %arg0, %c0_i32, %c0_i32_0 : i32, i32, i32
  }
}

</mosaic_0001>

<llo_original>
// kernel: ssim_pallas.1
$region0: #{ssim_pallas.1}
  #allocation0 [shape = 'u32[]', space=smem, size = 0x4, offset = 0x4, fixed_abs, tag = 'smem constant byte address 0x4 - core index']
  #allocation1 [shape = 'u32[72,128]{1,0:T(1,128)}', space=vmem, size = 0x9000, scoped, tag = 'internal scratch']
  %s0 = inlined_call_operand.vmem [shape: f32[9,64,128], index: 0, kind: input, shape index: {}]
  %s1 = inlined_call_operand.vmem [shape: f32[9,64,128], index: 1, kind: input, shape index: {}]
  %s2 = inlined_call_operand.vmem [shape: f32[1,8,128], index: 2, kind: output, shape index: {}]
  %s3 = sld [smem:[#allocation0]]
  $region22: #{ssim_pallas.1} parent=0
    _
  %s5 = ssub.s32 1, %s3
  %s6 = scalar_select 0, %s5, %s3
  // Predicated region
  $region2: #{ssim_pallas.1} parent=0 // pred_check
    _
  $region3: #{ssim_pallas.1} parent=0 // pred_check_branch
    %8 = sbr.rel (0) target = $region5
  $region4: #{ssim_pallas.1} parent=0 // pred_region
    %s9 = sadd.s32 0, 0
    %s10 = smul.u32 8, %s9
    %p11 = scmp.lt.s32.totalorder %s10, 7
    %s12 = scalar_select %p11, %s10, 7
    %s13 = smul.addr %s12, 8
    %s14 = scalar_lea.vmem %s0, %s13
    %s15 = sadd.s32 0, 0
    %s16 = smul.u32 8, %s15
  $region5: #{ssim_pallas.1} parent=0 // pred_fallthru
    _
  // Predicated region
  $region6: #{ssim_pallas.1} parent=0 // pred_check
    _
  $region7: #{ssim_pallas.1} parent=0 // pred_check_branch
    %18 = sbr.rel (0) target = $region9
  $region8: #{ssim_pallas.1} parent=0 // pred_region
    %s19 = sadd.s32 0, 0
    %s20 = smul.u32 8, %s19
    %p21 = scmp.lt.s32.totalorder %s20, 7
    %s22 = scalar_select %p21, %s20, 7
    %s23 = smul.addr %s22, 8
    %s24 = scalar_lea.vmem %s1, %s23
    %s25 = sadd.s32 0, 0
    %s26 = smul.u32 8, %s25
  $region9: #{ssim_pallas.1} parent=0 // pred_fallthru
    _
  %s27 = sadd.s32 0, 0
  %s28 = smul.u32 8, %s27
  %p29 = scmp.lt.s32.totalorder %s28, 7
  %s30 = scalar_select %p29, %s28, 7
  %s31 = smul.addr %s30, 8
  %s32 = scalar_lea.vmem %s0, %s31
  %s33 = sadd.s32 0, 0
  %s34 = smul.u32 8, %s33
  %p35 = scmp.lt.s32.totalorder %s34, 7
  %s36 = scalar_select %p35, %s34, 7
  %s37 = smul.addr %s36, 8
  %s38 = scalar_lea.vmem %s1, %s37
  %s39 = sadd.s32 0, 0
  %s40 = smul.u32 8, %s39
  %p41 = scmp.lt.s32.totalorder %s40, 7
  %s42 = scalar_select %p41, %s40, 7
  %s43 = smul.addr %s42, 8
  %s44 = scalar_lea.vmem %s0, %s43
  %s45 = sadd.s32 0, 0
  %s46 = smul.u32 8, %s45
  %s47 = sadd.s32 0, 0
  %s48 = smul.u32 8, %s47
  %p49 = scmp.lt.s32.totalorder %s48, 7
  %s50 = scalar_select %p49, %s48, 7
  %s51 = smul.addr %s50, 8
  %s52 = scalar_lea.vmem %s1, %s51
  %s53 = sadd.s32 0, 0
  %s54 = smul.u32 8, %s53
  %p55 = scmp.eq.s32.totalorder 0, 0
  // Predicated region
  $region10: #{ssim_pallas.1} parent=0 // pred_check
    %p56 = pneg %p55
  $region11: #{ssim_pallas.1} parent=0 // pred_check_branch
    %58 = sbr.rel (%p56) target = $region13
  $region12: #{ssim_pallas.1} parent=0 // pred_region
    %59 = vst [vmem:[%s2] sm:$0xff] 0.0
  $region13: #{ssim_pallas.1} parent=0 // pred_fallthru
    _
  %s60 = sadd.s32 0, 0
  %s61 = smul.u32 %s60, 8192
  %v62 = vlaneseq
  %v63 = vshrl.u32 %v62, 7
  %v64 = vadd.s32 %v63, 8
  %v65 = vadd.s32 %v63, 16
  %v66 = vadd.s32 %v63, 24
  %v67 = vadd.s32 %v63, 32
  %v68 = vadd.s32 %v63, 40
  %v69 = vadd.s32 %v63, 48
  %v70 = vadd.s32 %v63, 56
  %v71 = vmul.u32 %v63, 128
  %v72 = vmul.u32 %v64, 128
  %v73 = vmul.u32 %v65, 128
  %v74 = vmul.u32 %v66, 128
  %v75 = vmul.u32 %v67, 128
  %v76 = vmul.u32 %v68, 128
  %v77 = vmul.u32 %v69, 128
  %v78 = vmul.u32 %v70, 128
  %v79 = vlaneseq
  %v80 = vand.u32 %v79, 127
  %v81 = vadd.s32 %v71, %v80
  %v82 = vadd.s32 %v72, %v80
  %v83 = vadd.s32 %v73, %v80
  %v84 = vadd.s32 %v74, %v80
  %v85 = vadd.s32 %v75, %v80
  %v86 = vadd.s32 %v76, %v80
  %v87 = vadd.s32 %v77, %v80
  %v88 = vadd.s32 %v78, %v80
  %v89 = vld [vmem:[%s44] sm:$0xff]
  %v90 = vld [vmem:[%s44 + $0x8] sm:$0xff]
  %v91 = vld [vmem:[%s44 + $0x10] sm:$0xff]
  %v92 = vld [vmem:[%s44 + $0x18] sm:$0xff]
  %v93 = vld [vmem:[%s44 + $0x20] sm:$0xff]
  %v94 = vld [vmem:[%s44 + $0x28] sm:$0xff]
  %v95 = vld [vmem:[%s44 + $0x30] sm:$0xff]
  %v96 = vld [vmem:[%s44 + $0x38] sm:$0xff]
  %v97 = vld [vmem:[%s52] sm:$0xff]
  %v98 = vld [vmem:[%s52 + $0x8] sm:$0xff]
  %v99 = vld [vmem:[%s52 + $0x10] sm:$0xff]
  %v100 = vld [vmem:[%s52 + $0x18] sm:$0xff]
  %v101 = vld [vmem:[%s52 + $0x20] sm:$0xff]
  %v102 = vld [vmem:[%s52 + $0x28] sm:$0xff]
  %v103 = vld [vmem:[%s52 + $0x30] sm:$0xff]
  %v104 = vld [vmem:[%s52 + $0x38] sm:$0xff]
  %v105 = vmul.f32 %v89, 0.09474166
  %v106 = vmul.f32 %v90, 0.09474166
  %v107 = vmul.f32 %v91, 0.09474166
  %v108 = vmul.f32 %v92, 0.09474166
  %v109 = vmul.f32 %v93, 0.09474166
  %v110 = vmul.f32 %v94, 0.09474166
  %v111 = vmul.f32 %v95, 0.09474166
  %v112 = vmul.f32 %v96, 0.09474166
  %v113 = vmul.f32 %v97, 0.09474166
  %v114 = vmul.f32 %v98, 0.09474166
  %v115 = vmul.f32 %v99, 0.09474166
  %v116 = vmul.f32 %v100, 0.09474166
  %v117 = vmul.f32 %v101, 0.09474166
  %v118 = vmul.f32 %v102, 0.09474166
  %v119 = vmul.f32 %v103, 0.09474166
  %v120 = vmul.f32 %v104, 0.09474166
  %v121 = vadd.f32 %v105, 0.0
  %v122 = vadd.f32 %v106, 0.0
  %v123 = vadd.f32 %v107, 0.0
  %v124 = vadd.f32 %v108, 0.0
  %v125 = vadd.f32 %v109, 0.0
  %v126 = vadd.f32 %v110, 0.0
  %v127 = vadd.f32 %v111, 0.0
  %v128 = vadd.f32 %v112, 0.0
  %v129 = vadd.f32 %v113, 0.0
  %v130 = vadd.f32 %v114, 0.0
  %v131 = vadd.f32 %v115, 0.0
  %v132 = vadd.f32 %v116, 0.0
  %v133 = vadd.f32 %v117, 0.0
  %v134 = vadd.f32 %v118, 0.0
  %v135 = vadd.f32 %v119, 0.0
  %v136 = vadd.f32 %v120, 0.0
  %v137 = vmul.f32 %v105, %v89
  %v138 = vmul.f32 %v106, %v90
  %v139 = vmul.f32 %v107, %v91
  %v140 = vmul.f32 %v108, %v92
  %v141 = vmul.f32 %v109, %v93
  %v142 = vmul.f32 %v110, %v94
  %v143 = vmul.f32 %v111, %v95
  %v144 = vmul.f32 %v112, %v96
  %v145 = vadd.f32 %v137, 0.0
  %v146 = vadd.f32 %v138, 0.0
  %v147 = vadd.f32 %v139, 0.0
  %v148 = vadd.f32 %v140, 0.0
  %v149 = vadd.f32 %v141, 0.0
  %v150 = vadd.f32 %v142, 0.0
  %v151 = vadd.f32 %v143, 0.0
  %v152 = vadd.f32 %v144, 0.0
  %v153 = vmul.f32 %v113, %v97
  %v154 = vmul.f32 %v114, %v98
  %v155 = vmul.f32 %v115, %v99
  %v156 = vmul.f32 %v116, %v100
  %v157 = vmul.f32 %v117, %v101
  %v158 = vmul.f32 %v118, %v102
  %v159 = vmul.f32 %v119, %v103
  %v160 = vmul.f32 %v120, %v104
  %v161 = vadd.f32 %v153, 0.0
  %v162 = vadd.f32 %v154, 0.0
  %v163 = vadd.f32 %v155, 0.0
  %v164 = vadd.f32 %v156, 0.0
  %v165 = vadd.f32 %v157, 0.0
  %v166 = vadd.f32 %v158, 0.0
  %v167 = vadd.f32 %v159, 0.0
  %v168 = vadd.f32 %v160, 0.0
  %v169 = vmul.f32 %v105, %v97
  %v170 = vmul.f32 %v106, %v98
  %v171 = vmul.f32 %v107, %v99
  %v172 = vmul.f32 %v108, %v100
  %v173 = vmul.f32 %v109, %v101
  %v174 = vmul.f32 %v110, %v102
  %v175 = vmul.f32 %v111, %v103
  %v176 = vmul.f32 %v112, %v104
  %v177 = vadd.f32 %v169, 0.0
  %v178 = vadd.f32 %v170, 0.0
  %v179 = vadd.f32 %v171, 0.0
  %v180 = vadd.f32 %v172, 0.0
  %v181 = vadd.f32 %v173, 0.0
  %v182 = vadd.f32 %v174, 0.0
  %v183 = vadd.f32 %v175, 0.0
  %v184 = vadd.f32 %v176, 0.0
  %s185 = sadd.s32 0, 64
  %s186 = scalar_lea.vmem %s44, %s185
  %v187 = vld [vmem:[%s186] sm:$0xff]
  %v188 = vld [vmem:[%s186 + $0x8] sm:$0xff]
  %v189 = vld [vmem:[%s186 + $0x10] sm:$0xff]
  %v190 = vld [vmem:[%s186 + $0x18] sm:$0xff]
  %v191 = vld [vmem:[%s186 + $0x20] sm:$0xff]
  %v192 = vld [vmem:[%s186 + $0x28] sm:$0xff]
  %v193 = vld [vmem:[%s186 + $0x30] sm:$0xff]
  %v194 = vld [vmem:[%s186 + $0x38] sm:$0xff]
  %s195 = scalar_lea.vmem %s52, %s185
  %v196 = vld [vmem:[%s195] sm:$0xff]
  %v197 = vld [vmem:[%s195 + $0x8] sm:$0xff]
  %v198 = vld [vmem:[%s195 + $0x10] sm:$0xff]
  %v199 = vld [vmem:[%s195 + $0x18] sm:$0xff]
  %v200 = vld [vmem:[%s195 + $0x20] sm:$0xff]
  %v201 = vld [vmem:[%s195 + $0x28] sm:$0xff]
  %v202 = vld [vmem:[%s195 + $0x30] sm:$0xff]
  %v203 = vld [vmem:[%s195 + $0x38] sm:$0xff]
  %v204 = vmul.f32 %v187, 0.118318014
  %v205 = vmul.f32 %v188, 0.118318014
  %v206 = vmul.f32 %v189, 0.118318014
  %v207 = vmul.f32 %v190, 0.118318014
  %v208 = vmul.f32 %v191, 0.118318014
  %v209 = vmul.f32 %v192, 0.118318014
  %v210 = vmul.f32 %v193, 0.118318014
  %v211 = vmul.f32 %v194, 0.118318014
  %v212 = vmul.f32 %v196, 0.118318014
  %v213 = vmul.f32 %v197, 0.118318014
  %v214 = vmul.f32 %v198, 0.118318014
  %v215 = vmul.f32 %v199, 0.118318014
  %v216 = vmul.f32 %v200, 0.118318014
  %v217 = vmul.f32 %v201, 0.118318014
  %v218 = vmul.f32 %v202, 0.118318014
  %v219 = vmul.f32 %v203, 0.118318014
  %v220 = vadd.f32 %v121, %v204
  %v221 = vadd.f32 %v122, %v205
  %v222 = vadd.f32 %v123, %v206
  %v223 = vadd.f32 %v124, %v207
  %v224 = vadd.f32 %v125, %v208
  %v225 = vadd.f32 %v126, %v209
  %v226 = vadd.f32 %v127, %v210
  %v227 = vadd.f32 %v128, %v211
  %v228 = vadd.f32 %v129, %v212
  %v229 = vadd.f32 %v130, %v213
  %v230 = vadd.f32 %v131, %v214
  %v231 = vadd.f32 %v132, %v215
  %v232 = vadd.f32 %v133, %v216
  %v233 = vadd.f32 %v134, %v217
  %v234 = vadd.f32 %v135, %v218
  %v235 = vadd.f32 %v136, %v219
  %v236 = vmul.f32 %v204, %v187
  %v237 = vmul.f32 %v205, %v188
  %v238 = vmul.f32 %v206, %v189
  %v239 = vmul.f32 %v207, %v190
  %v240 = vmul.f32 %v208, %v191
  %v241 = vmul.f32 %v209, %v192
  %v242 = vmul.f32 %v210, %v193
  %v243 = vmul.f32 %v211, %v194
  %v244 = vadd.f32 %v145, %v236
  %v245 = vadd.f32 %v146, %v237
  %v246 = vadd.f32 %v147, %v238
  %v247 = vadd.f32 %v148, %v239
  %v248 = vadd.f32 %v149, %v240
  %v249 = vadd.f32 %v150, %v241
  %v250 = vadd.f32 %v151, %v242
  %v251 = vadd.f32 %v152, %v243
  %v252 = vmul.f32 %v212, %v196
  %v253 = vmul.f32 %v213, %v197
  %v254 = vmul.f32 %v214, %v198
  %v255 = vmul.f32 %v215, %v199
  %v256 = vmul.f32 %v216, %v200
  %v257 = vmul.f32 %v217, %v201
  %v258 = vmul.f32 %v218, %v202
  %v259 = vmul.f32 %v219, %v203
  %v260 = vadd.f32 %v161, %v252
  %v261 = vadd.f32 %v162, %v253
  %v262 = vadd.f32 %v163, %v254
  %v263 = vadd.f32 %v164, %v255
  %v264 = vadd.f32 %v165, %v256
  %v265 = vadd.f32 %v166, %v257
  %v266 = vadd.f32 %v167, %v258
  %v267 = vadd.f32 %v168, %v259
  %v268 = vmul.f32 %v204, %v196
  %v269 = vmul.f32 %v205, %v197
  %v270 = vmul.f32 %v206, %v198
  %v271 = vmul.f32 %v207, %v199
  %v272 = vmul.f32 %v208, %v200
  %v273 = vmul.f32 %v209, %v201
  %v274 = vmul.f32 %v210, %v202
  %v275 = vmul.f32 %v211, %v203
  %v276 = vadd.f32 %v177, %v268
  %v277 = vadd.f32 %v178, %v269
  %v278 = vadd.f32 %v179, %v270
  %v279 = vadd.f32 %v180, %v271
  %v280 = vadd.f32 %v181, %v272
  %v281 = vadd.f32 %v182, %v273
  %v282 = vadd.f32 %v183, %v274
  %v283 = vadd.f32 %v184, %v275
  %s284 = sadd.s32 0, 128
  %s285 = scalar_lea.vmem %s44, %s284
  %v286 = vld [vmem:[%s285] sm:$0xff]
  %v287 = vld [vmem:[%s285 + $0x8] sm:$0xff]
  %v288 = vld [vmem:[%s285 + $0x10] sm:$0xff]
  %v289 = vld [vmem:[%s285 + $0x18] sm:$0xff]
  %v290 = vld [vmem:[%s285 + $0x20] sm:$0xff]
  %v291 = vld [vmem:[%s285 + $0x28] sm:$0xff]
  %v292 = vld [vmem:[%s285 + $0x30] sm:$0xff]
  %v293 = vld [vmem:[%s285 + $0x38] sm:$0xff]
  %s294 = scalar_lea.vmem %s52, %s284
  %v295 = vld [vmem:[%s294] sm:$0xff]
  %v296 = vld [vmem:[%s294 + $0x8] sm:$0xff]
  %v297 = vld [vmem:[%s294 + $0x10] sm:$0xff]
  %v298 = vld [vmem:[%s294 + $0x18] sm:$0xff]
  %v299 = vld [vmem:[%s294 + $0x20] sm:$0xff]
  %v300 = vld [vmem:[%s294 + $0x28] sm:$0xff]
  %v301 = vld [vmem:[%s294 + $0x30] sm:$0xff]
  %v302 = vld [vmem:[%s294 + $0x38] sm:$0xff]
  %v303 = vmul.f32 %v286, 0.09474166
  %v304 = vmul.f32 %v287, 0.09474166
  %v305 = vmul.f32 %v288, 0.09474166
  %v306 = vmul.f32 %v289, 0.09474166
  %v307 = vmul.f32 %v290, 0.09474166
  %v308 = vmul.f32 %v291, 0.09474166
  %v309 = vmul.f32 %v292, 0.09474166
  %v310 = vmul.f32 %v293, 0.09474166
  %v311 = vmul.f32 %v295, 0.09474166
  %v312 = vmul.f32 %v296, 0.09474166
  %v313 = vmul.f32 %v297, 0.09474166
  %v314 = vmul.f32 %v298, 0.09474166
  %v315 = vmul.f32 %v299, 0.09474166
  %v316 = vmul.f32 %v300, 0.09474166
  %v317 = vmul.f32 %v301, 0.09474166
  %v318 = vmul.f32 %v302, 0.09474166
  %v319 = vadd.f32 %v220, %v303
  %v320 = vadd.f32 %v221, %v304
  %v321 = vadd.f32 %v222, %v305
  %v322 = vadd.f32 %v223, %v306
  %v323 = vadd.f32 %v224, %v307
  %v324 = vadd.f32 %v225, %v308
  %v325 = vadd.f32 %v226, %v309
  %v326 = vadd.f32 %v227, %v310
  %v327 = vadd.f32 %v228, %v311
  %v328 = vadd.f32 %v229, %v312
  %v329 = vadd.f32 %v230, %v313
  %v330 = vadd.f32 %v231, %v314
  %v331 = vadd.f32 %v232, %v315
  %v332 = vadd.f32 %v233, %v316
  %v333 = vadd.f32 %v234, %v317
  %v334 = vadd.f32 %v235, %v318
  %v335 = vmul.f32 %v303, %v286
  %v336 = vmul.f32 %v304, %v287
  %v337 = vmul.f32 %v305, %v288
  %v338 = vmul.f32 %v306, %v289
  %v339 = vmul.f32 %v307, %v290
  %v340 = vmul.f32 %v308, %v291
  %v341 = vmul.f32 %v309, %v292
  %v342 = vmul.f32 %v310, %v293
  %v343 = vadd.f32 %v244, %v335
  %v344 = vadd.f32 %v245, %v336
  %v345 = vadd.f32 %v246, %v337
  %v346 = vadd.f32 %v247, %v338
  %v347 = vadd.f32 %v248, %v339
  %v348 = vadd.f32 %v249, %v340
  %v349 = vadd.f32 %v250, %v341
  %v350 = vadd.f32 %v251, %v342
  %v351 = vmul.f32 %v311, %v295
  %v352 = vmul.f32 %v312, %v296
  %v353 = vmul.f32 %v313, %v297
  %v354 = vmul.f32 %v314, %v298
  %v355 = vmul.f32 %v315, %v299
  %v356 = vmul.f32 %v316, %v300
  %v357 = vmul.f32 %v317, %v301
  %v358 = vmul.f32 %v318, %v302
  %v359 = vadd.f32 %v260, %v351
  %v360 = vadd.f32 %v261, %v352
  %v361 = vadd.f32 %v262, %v353
  %v362 = vadd.f32 %v263, %v354
  %v363 = vadd.f32 %v264, %v355
  %v364 = vadd.f32 %v265, %v356
  %v365 = vadd.f32 %v266, %v357
  %v366 = vadd.f32 %v267, %v358
  %v367 = vmul.f32 %v303, %v295
  %v368 = vmul.f32 %v304, %v296
  %v369 = vmul.f32 %v305, %v297
  %v370 = vmul.f32 %v306, %v298
  %v371 = vmul.f32 %v307, %v299
  %v372 = vmul.f32 %v308, %v300
  %v373 = vmul.f32 %v309, %v301
  %v374 = vmul.f32 %v310, %v302
  %v375 = vadd.f32 %v276, %v367
  %v376 = vadd.f32 %v277, %v368
  %v377 = vadd.f32 %v278, %v369
  %v378 = vadd.f32 %v279, %v370
  %v379 = vadd.f32 %v280, %v371
  %v380 = vadd.f32 %v281, %v372
  %v381 = vadd.f32 %v282, %v373
  %v382 = vadd.f32 %v283, %v374
  %s383 = sadd.s32 0, 192
  %s384 = scalar_lea.vmem %s44, %s383
  %v385 = vld [vmem:[%s384] sm:$0xff]
  %v386 = vld [vmem:[%s384 + $0x8] sm:$0xff]
  %v387 = vld [vmem:[%s384 + $0x10] sm:$0xff]
  %v388 = vld [vmem:[%s384 + $0x18] sm:$0xff]
  %v389 = vld [vmem:[%s384 + $0x20] sm:$0xff]
  %v390 = vld [vmem:[%s384 + $0x28] sm:$0xff]
  %v391 = vld [vmem:[%s384 + $0x30] sm:$0xff]
  %v392 = vld [vmem:[%s384 + $0x38] sm:$0xff]
  %s393 = scalar_lea.vmem %s52, %s383
  %v394 = vld [vmem:[%s393] sm:$0xff]
  %v395 = vld [vmem:[%s393 + $0x8] sm:$0xff]
  %v396 = vld [vmem:[%s393 + $0x10] sm:$0xff]
  %v397 = vld [vmem:[%s393 + $0x18] sm:$0xff]
  %v398 = vld [vmem:[%s393 + $0x20] sm:$0xff]
  %v399 = vld [vmem:[%s393 + $0x28] sm:$0xff]
  %v400 = vld [vmem:[%s393 + $0x30] sm:$0xff]
  %v401 = vld [vmem:[%s393 + $0x38] sm:$0xff]
  %v402 = vmul.f32 %v385, 0.118318014
  %v403 = vmul.f32 %v386, 0.118318014
  %v404 = vmul.f32 %v387, 0.118318014
  %v405 = vmul.f32 %v388, 0.118318014
  %v406 = vmul.f32 %v389, 0.118318014
  %v407 = vmul.f32 %v390, 0.118318014
  %v408 = vmul.f32 %v391, 0.118318014
  %v409 = vmul.f32 %v392, 0.118318014
  %v410 = vmul.f32 %v394, 0.118318014
  %v411 = vmul.f32 %v395, 0.118318014
  %v412 = vmul.f32 %v396, 0.118318014
  %v413 = vmul.f32 %v397, 0.118318014
  %v414 = vmul.f32 %v398, 0.118318014
  %v415 = vmul.f32 %v399, 0.118318014
  %v416 = vmul.f32 %v400, 0.118318014
  %v417 = vmul.f32 %v401, 0.118318014
  %v418 = vadd.f32 %v319, %v402
  %v419 = vadd.f32 %v320, %v403
  %v420 = vadd.f32 %v321, %v404
  %v421 = vadd.f32 %v322, %v405
  %v422 = vadd.f32 %v323, %v406
  %v423 = vadd.f32 %v324, %v407
  %v424 = vadd.f32 %v325, %v408
  %v425 = vadd.f32 %v326, %v409
  %v426 = vadd.f32 %v327, %v410
  %v427 = vadd.f32 %v328, %v411
  %v428 = vadd.f32 %v329, %v412
  %v429 = vadd.f32 %v330, %v413
  %v430 = vadd.f32 %v331, %v414
  %v431 = vadd.f32 %v332, %v415
  %v432 = vadd.f32 %v333, %v416
  %v433 = vadd.f32 %v334, %v417
  %v434 = vmul.f32 %v402, %v385
  %v435 = vmul.f32 %v403, %v386
  %v436 = vmul.f32 %v404, %v387
  %v437 = vmul.f32 %v405, %v388
  %v438 = vmul.f32 %v406, %v389
  %v439 = vmul.f32 %v407, %v390
  %v440 = vmul.f32 %v408, %v391
  %v441 = vmul.f32 %v409, %v392
  %v442 = vadd.f32 %v343, %v434
  %v443 = vadd.f32 %v344, %v435
  %v444 = vadd.f32 %v345, %v436
  %v445 = vadd.f32 %v346, %v437
  %v446 = vadd.f32 %v347, %v438
  %v447 = vadd.f32 %v348, %v439
  %v448 = vadd.f32 %v349, %v440
  %v449 = vadd.f32 %v350, %v441
  %v450 = vmul.f32 %v410, %v394
  %v451 = vmul.f32 %v411, %v395
  %v452 = vmul.f32 %v412, %v396
  %v453 = vmul.f32 %v413, %v397
  %v454 = vmul.f32 %v414, %v398
  %v455 = vmul.f32 %v415, %v399
  %v456 = vmul.f32 %v416, %v400
  %v457 = vmul.f32 %v417, %v401
  %v458 = vadd.f32 %v359, %v450
  %v459 = vadd.f32 %v360, %v451
  %v460 = vadd.f32 %v361, %v452
  %v461 = vadd.f32 %v362, %v453
  %v462 = vadd.f32 %v363, %v454
  %v463 = vadd.f32 %v364, %v455
  %v464 = vadd.f32 %v365, %v456
  %v465 = vadd.f32 %v366, %v457
  %v466 = vmul.f32 %v402, %v394
  %v467 = vmul.f32 %v403, %v395
  %v468 = vmul.f32 %v404, %v396
  %v469 = vmul.f32 %v405, %v397
  %v470 = vmul.f32 %v406, %v398
  %v471 = vmul.f32 %v407, %v399
  %v472 = vmul.f32 %v408, %v400
  %v473 = vmul.f32 %v409, %v401
  %v474 = vadd.f32 %v375, %v466
  %v475 = vadd.f32 %v376, %v467
  %v476 = vadd.f32 %v377, %v468
  %v477 = vadd.f32 %v378, %v469
  %v478 = vadd.f32 %v379, %v470
  %v479 = vadd.f32 %v380, %v471
  %v480 = vadd.f32 %v381, %v472
  %v481 = vadd.f32 %v382, %v473
  %s482 = sadd.s32 0, 256
  %s483 = scalar_lea.vmem %s44, %s482
  %v484 = vld [vmem:[%s483] sm:$0xff]
  %v485 = vld [vmem:[%s483 + $0x8] sm:$0xff]
  %v486 = vld [vmem:[%s483 + $0x10] sm:$0xff]
  %v487 = vld [vmem:[%s483 + $0x18] sm:$0xff]
  %v488 = vld [vmem:[%s483 + $0x20] sm:$0xff]
  %v489 = vld [vmem:[%s483 + $0x28] sm:$0xff]
  %v490 = vld [vmem:[%s483 + $0x30] sm:$0xff]
  %v491 = vld [vmem:[%s483 + $0x38] sm:$0xff]
  %s492 = scalar_lea.vmem %s52, %s482
  %v493 = vld [vmem:[%s492] sm:$0xff]
  %v494 = vld [vmem:[%s492 + $0x8] sm:$0xff]
  %v495 = vld [vmem:[%s492 + $0x10] sm:$0xff]
  %v496 = vld [vmem:[%s492 + $0x18] sm:$0xff]
  %v497 = vld [vmem:[%s492 + $0x20] sm:$0xff]
  %v498 = vld [vmem:[%s492 + $0x28] sm:$0xff]
  %v499 = vld [vmem:[%s492 + $0x30] sm:$0xff]
  %v500 = vld [vmem:[%s492 + $0x38] sm:$0xff]
  %v501 = vmul.f32 %v484, 0.14776132
  %v502 = vmul.f32 %v485, 0.14776132
  %v503 = vmul.f32 %v486, 0.14776132
  %v504 = vmul.f32 %v487, 0.14776132
  %v505 = vmul.f32 %v488, 0.14776132
  %v506 = vmul.f32 %v489, 0.14776132
  %v507 = vmul.f32 %v490, 0.14776132
  %v508 = vmul.f32 %v491, 0.14776132
  %v509 = vmul.f32 %v493, 0.14776132
  %v510 = vmul.f32 %v494, 0.14776132
  %v511 = vmul.f32 %v495, 0.14776132
  %v512 = vmul.f32 %v496, 0.14776132
  %v513 = vmul.f32 %v497, 0.14776132
  %v514 = vmul.f32 %v498, 0.14776132
  %v515 = vmul.f32 %v499, 0.14776132
  %v516 = vmul.f32 %v500, 0.14776132
  %v517 = vadd.f32 %v418, %v501
  %v518 = vadd.f32 %v419, %v502
  %v519 = vadd.f32 %v420, %v503
  %v520 = vadd.f32 %v421, %v504
  %v521 = vadd.f32 %v422, %v505
  %v522 = vadd.f32 %v423, %v506
  %v523 = vadd.f32 %v424, %v507
  %v524 = vadd.f32 %v425, %v508
  %v525 = vadd.f32 %v426, %v509
  %v526 = vadd.f32 %v427, %v510
  %v527 = vadd.f32 %v428, %v511
  %v528 = vadd.f32 %v429, %v512
  %v529 = vadd.f32 %v430, %v513
  %v530 = vadd.f32 %v431, %v514
  %v531 = vadd.f32 %v432, %v515
  %v532 = vadd.f32 %v433, %v516
  %v533 = vmul.f32 %v501, %v484
  %v534 = vmul.f32 %v502, %v485
  %v535 = vmul.f32 %v503, %v486
  %v536 = vmul.f32 %v504, %v487
  %v537 = vmul.f32 %v505, %v488
  %v538 = vmul.f32 %v506, %v489
  %v539 = vmul.f32 %v507, %v490
  %v540 = vmul.f32 %v508, %v491
  %v541 = vadd.f32 %v442, %v533
  %v542 = vadd.f32 %v443, %v534
  %v543 = vadd.f32 %v444, %v535
  %v544 = vadd.f32 %v445, %v536
  %v545 = vadd.f32 %v446, %v537
  %v546 = vadd.f32 %v447, %v538
  %v547 = vadd.f32 %v448, %v539
  %v548 = vadd.f32 %v449, %v540
  %v549 = vmul.f32 %v509, %v493
  %v550 = vmul.f32 %v510, %v494
  %v551 = vmul.f32 %v511, %v495
  %v552 = vmul.f32 %v512, %v496
  %v553 = vmul.f32 %v513, %v497
  %v554 = vmul.f32 %v514, %v498
  %v555 = vmul.f32 %v515, %v499
  %v556 = vmul.f32 %v516, %v500
  %v557 = vadd.f32 %v458, %v549
  %v558 = vadd.f32 %v459, %v550
  %v559 = vadd.f32 %v460, %v551
  %v560 = vadd.f32 %v461, %v552
  %v561 = vadd.f32 %v462, %v553
  %v562 = vadd.f32 %v463, %v554
  %v563 = vadd.f32 %v464, %v555
  %v564 = vadd.f32 %v465, %v556
  %v565 = vmul.f32 %v501, %v493
  %v566 = vmul.f32 %v502, %v494
  %v567 = vmul.f32 %v503, %v495
  %v568 = vmul.f32 %v504, %v496
  %v569 = vmul.f32 %v505, %v497
  %v570 = vmul.f32 %v506, %v498
  %v571 = vmul.f32 %v507, %v499
  %v572 = vmul.f32 %v508, %v500
  %v573 = vadd.f32 %v474, %v565
  %v574 = vadd.f32 %v475, %v566
  %v575 = vadd.f32 %v476, %v567
  %v576 = vadd.f32 %v477, %v568
  %v577 = vadd.f32 %v478, %v569
  %v578 = vadd.f32 %v479, %v570
  %v579 = vadd.f32 %v480, %v571
  %v580 = vadd.f32 %v481, %v572
  %s581 = sadd.s32 0, 320
  %s582 = scalar_lea.vmem %s44, %s581
  %v583 = vld [vmem:[%s582] sm:$0xff]
  %v584 = vld [vmem:[%s582 + $0x8] sm:$0xff]
  %v585 = vld [vmem:[%s582 + $0x10] sm:$0xff]
  %v586 = vld [vmem:[%s582 + $0x18] sm:$0xff]
  %v587 = vld [vmem:[%s582 + $0x20] sm:$0xff]
  %v588 = vld [vmem:[%s582 + $0x28] sm:$0xff]
  %v589 = vld [vmem:[%s582 + $0x30] sm:$0xff]
  %v590 = vld [vmem:[%s582 + $0x38] sm:$0xff]
  %s591 = scalar_lea.vmem %s52, %s581
  %v592 = vld [vmem:[%s591] sm:$0xff]
  %v593 = vld [vmem:[%s591 + $0x8] sm:$0xff]
  %v594 = vld [vmem:[%s591 + $0x10] sm:$0xff]
  %v595 = vld [vmem:[%s591 + $0x18] sm:$0xff]
  %v596 = vld [vmem:[%s591 + $0x20] sm:$0xff]
  %v597 = vld [vmem:[%s591 + $0x28] sm:$0xff]
  %v598 = vld [vmem:[%s591 + $0x30] sm:$0xff]
  %v599 = vld [vmem:[%s591 + $0x38] sm:$0xff]
  %v600 = vmul.f32 %v583, 0.118318014
  %v601 = vmul.f32 %v584, 0.118318014
  %v602 = vmul.f32 %v585, 0.118318014
  %v603 = vmul.f32 %v586, 0.118318014
  %v604 = vmul.f32 %v587, 0.118318014
  %v605 = vmul.f32 %v588, 0.118318014
  %v606 = vmul.f32 %v589, 0.118318014
  %v607 = vmul.f32 %v590, 0.118318014
  %v608 = vmul.f32 %v592, 0.118318014
  %v609 = vmul.f32 %v593, 0.118318014
  %v610 = vmul.f32 %v594, 0.118318014
  %v611 = vmul.f32 %v595, 0.118318014
  %v612 = vmul.f32 %v596, 0.118318014
  %v613 = vmul.f32 %v597, 0.118318014
  %v614 = vmul.f32 %v598, 0.118318014
  %v615 = vmul.f32 %v599, 0.118318014
  %v616 = vadd.f32 %v517, %v600
  %v617 = vadd.f32 %v518, %v601
  %v618 = vadd.f32 %v519, %v602
  %v619 = vadd.f32 %v520, %v603
  %v620 = vadd.f32 %v521, %v604
  %v621 = vadd.f32 %v522, %v605
  %v622 = vadd.f32 %v523, %v606
  %v623 = vadd.f32 %v524, %v607
  %v624 = vadd.f32 %v525, %v608
  %v625 = vadd.f32 %v526, %v609
  %v626 = vadd.f32 %v527, %v610
  %v627 = vadd.f32 %v528, %v611
  %v628 = vadd.f32 %v529, %v612
  %v629 = vadd.f32 %v530, %v613
  %v630 = vadd.f32 %v531, %v614
  %v631 = vadd.f32 %v532, %v615
  %v632 = vmul.f32 %v600, %v583
  %v633 = vmul.f32 %v601, %v584
  %v634 = vmul.f32 %v602, %v585
  %v635 = vmul.f32 %v603, %v586
  %v636 = vmul.f32 %v604, %v587
  %v637 = vmul.f32 %v605, %v588
  %v638 = vmul.f32 %v606, %v589
  %v639 = vmul.f32 %v607, %v590
  %v640 = vadd.f32 %v541, %v632
  %v641 = vadd.f32 %v542, %v633
  %v642 = vadd.f32 %v543, %v634
  %v643 = vadd.f32 %v544, %v635
  %v644 = vadd.f32 %v545, %v636
  %v645 = vadd.f32 %v546, %v637
  %v646 = vadd.f32 %v547, %v638
  %v647 = vadd.f32 %v548, %v639
  %v648 = vmul.f32 %v608, %v592
  %v649 = vmul.f32 %v609, %v593
  %v650 = vmul.f32 %v610, %v594
  %v651 = vmul.f32 %v611, %v595
  %v652 = vmul.f32 %v612, %v596
  %v653 = vmul.f32 %v613, %v597
  %v654 = vmul.f32 %v614, %v598
  %v655 = vmul.f32 %v615, %v599
  %v656 = vadd.f32 %v557, %v648
  %v657 = vadd.f32 %v558, %v649
  %v658 = vadd.f32 %v559, %v650
  %v659 = vadd.f32 %v560, %v651
  %v660 = vadd.f32 %v561, %v652
  %v661 = vadd.f32 %v562, %v653
  %v662 = vadd.f32 %v563, %v654
  %v663 = vadd.f32 %v564, %v655
  %v664 = vmul.f32 %v600, %v592
  %v665 = vmul.f32 %v601, %v593
  %v666 = vmul.f32 %v602, %v594
  %v667 = vmul.f32 %v603, %v595
  %v668 = vmul.f32 %v604, %v596
  %v669 = vmul.f32 %v605, %v597
  %v670 = vmul.f32 %v606, %v598
  %v671 = vmul.f32 %v607, %v599
  %v672 = vadd.f32 %v573, %v664
  %v673 = vadd.f32 %v574, %v665
  %v674 = vadd.f32 %v575, %v666
  %v675 = vadd.f32 %v576, %v667
  %v676 = vadd.f32 %v577, %v668
  %v677 = vadd.f32 %v578, %v669
  %v678 = vadd.f32 %v579, %v670
  %v679 = vadd.f32 %v580, %v671
  %s680 = sadd.s32 0, 384
  %s681 = scalar_lea.vmem %s44, %s680
  %v682 = vld [vmem:[%s681] sm:$0xff]
  %v683 = vld [vmem:[%s681 + $0x8] sm:$0xff]
  %v684 = vld [vmem:[%s681 + $0x10] sm:$0xff]
  %v685 = vld [vmem:[%s681 + $0x18] sm:$0xff]
  %v686 = vld [vmem:[%s681 + $0x20] sm:$0xff]
  %v687 = vld [vmem:[%s681 + $0x28] sm:$0xff]
  %v688 = vld [vmem:[%s681 + $0x30] sm:$0xff]
  %v689 = vld [vmem:[%s681 + $0x38] sm:$0xff]
  %s690 = scalar_lea.vmem %s52, %s680
  %v691 = vld [vmem:[%s690] sm:$0xff]
  %v692 = vld [vmem:[%s690 + $0x8] sm:$0xff]
  %v693 = vld [vmem:[%s690 + $0x10] sm:$0xff]
  %v694 = vld [vmem:[%s690 + $0x18] sm:$0xff]
  %v695 = vld [vmem:[%s690 + $0x20] sm:$0xff]
  %v696 = vld [vmem:[%s690 + $0x28] sm:$0xff]
  %v697 = vld [vmem:[%s690 + $0x30] sm:$0xff]
  %v698 = vld [vmem:[%s690 + $0x38] sm:$0xff]
  %v699 = vmul.f32 %v682, 0.09474166
  %v700 = vmul.f32 %v683, 0.09474166
  %v701 = vmul.f32 %v684, 0.09474166
  %v702 = vmul.f32 %v685, 0.09474166
  %v703 = vmul.f32 %v686, 0.09474166
  %v704 = vmul.f32 %v687, 0.09474166
  %v705 = vmul.f32 %v688, 0.09474166
  %v706 = vmul.f32 %v689, 0.09474166
  %v707 = vmul.f32 %v691, 0.09474166
  %v708 = vmul.f32 %v692, 0.09474166
  %v709 = vmul.f32 %v693, 0.09474166
  %v710 = vmul.f32 %v694, 0.09474166
  %v711 = vmul.f32 %v695, 0.09474166
  %v712 = vmul.f32 %v696, 0.09474166
  %v713 = vmul.f32 %v697, 0.09474166
  %v714 = vmul.f32 %v698, 0.09474166
  %v715 = vadd.f32 %v616, %v699
  %v716 = vadd.f32 %v617, %v700
  %v717 = vadd.f32 %v618, %v701
  %v718 = vadd.f32 %v619, %v702
  %v719 = vadd.f32 %v620, %v703
  %v720 = vadd.f32 %v621, %v704
  %v721 = vadd.f32 %v622, %v705
  %v722 = vadd.f32 %v623, %v706
  %v723 = vadd.f32 %v624, %v707
  %v724 = vadd.f32 %v625, %v708
  %v725 = vadd.f32 %v626, %v709
  %v726 = vadd.f32 %v627, %v710
  %v727 = vadd.f32 %v628, %v711
  %v728 = vadd.f32 %v629, %v712
  %v729 = vadd.f32 %v630, %v713
  %v730 = vadd.f32 %v631, %v714
  %v731 = vmul.f32 %v699, %v682
  %v732 = vmul.f32 %v700, %v683
  %v733 = vmul.f32 %v701, %v684
  %v734 = vmul.f32 %v702, %v685
  %v735 = vmul.f32 %v703, %v686
  %v736 = vmul.f32 %v704, %v687
  %v737 = vmul.f32 %v705, %v688
  %v738 = vmul.f32 %v706, %v689
  %v739 = vadd.f32 %v640, %v731
  %v740 = vadd.f32 %v641, %v732
  %v741 = vadd.f32 %v642, %v733
  %v742 = vadd.f32 %v643, %v734
  %v743 = vadd.f32 %v644, %v735
  %v744 = vadd.f32 %v645, %v736
  %v745 = vadd.f32 %v646, %v737
  %v746 = vadd.f32 %v647, %v738
  %v747 = vmul.f32 %v707, %v691
  %v748 = vmul.f32 %v708, %v692
  %v749 = vmul.f32 %v709, %v693
  %v750 = vmul.f32 %v710, %v694
  %v751 = vmul.f32 %v711, %v695
  %v752 = vmul.f32 %v712, %v696
  %v753 = vmul.f32 %v713, %v697
  %v754 = vmul.f32 %v714, %v698
  %v755 = vadd.f32 %v656, %v747
  %v756 = vadd.f32 %v657, %v748
  %v757 = vadd.f32 %v658, %v749
  %v758 = vadd.f32 %v659, %v750
  %v759 = vadd.f32 %v660, %v751
  %v760 = vadd.f32 %v661, %v752
  %v761 = vadd.f32 %v662, %v753
  %v762 = vadd.f32 %v663, %v754
  %v763 = vmul.f32 %v699, %v691
  %v764 = vmul.f32 %v700, %v692
  %v765 = vmul.f32 %v701, %v693
  %v766 = vmul.f32 %v702, %v694
  %v767 = vmul.f32 %v703, %v695
  %v768 = vmul.f32 %v704, %v696
  %v769 = vmul.f32 %v705, %v697
  %v770 = vmul.f32 %v706, %v698
  %v771 = vadd.f32 %v672, %v763
  %v772 = vadd.f32 %v673, %v764
  %v773 = vadd.f32 %v674, %v765
  %v774 = vadd.f32 %v675, %v766
  %v775 = vadd.f32 %v676, %v767
  %v776 = vadd.f32 %v677, %v768
  %v777 = vadd.f32 %v678, %v769
  %v778 = vadd.f32 %v679, %v770
  %s779 = sadd.s32 0, 448
  %s780 = scalar_lea.vmem %s44, %s779
  %v781 = vld [vmem:[%s780] sm:$0xff]
  %v782 = vld [vmem:[%s780 + $0x8] sm:$0xff]
  %v783 = vld [vmem:[%s780 + $0x10] sm:$0xff]
  %v784 = vld [vmem:[%s780 + $0x18] sm:$0xff]
  %v785 = vld [vmem:[%s780 + $0x20] sm:$0xff]
  %v786 = vld [vmem:[%s780 + $0x28] sm:$0xff]
  %v787 = vld [vmem:[%s780 + $0x30] sm:$0xff]
  %v788 = vld [vmem:[%s780 + $0x38] sm:$0xff]
  %s789 = scalar_lea.vmem %s52, %s779
  %v790 = vld [vmem:[%s789] sm:$0xff]
  %v791 = vld [vmem:[%s789 + $0x8] sm:$0xff]
  %v792 = vld [vmem:[%s789 + $0x10] sm:$0xff]
  %v793 = vld [vmem:[%s789 + $0x18] sm:$0xff]
  %v794 = vld [vmem:[%s789 + $0x20] sm:$0xff]
  %v795 = vld [vmem:[%s789 + $0x28] sm:$0xff]
  %v796 = vld [vmem:[%s789 + $0x30] sm:$0xff]
  %v797 = vld [vmem:[%s789 + $0x38] sm:$0xff]
  %v798 = vmul.f32 %v781, 0.118318014
  %v799 = vmul.f32 %v782, 0.118318014
  %v800 = vmul.f32 %v783, 0.118318014
  %v801 = vmul.f32 %v784, 0.118318014
  %v802 = vmul.f32 %v785, 0.118318014
  %v803 = vmul.f32 %v786, 0.118318014
  %v804 = vmul.f32 %v787, 0.118318014
  %v805 = vmul.f32 %v788, 0.118318014
  %v806 = vmul.f32 %v790, 0.118318014
  %v807 = vmul.f32 %v791, 0.118318014
  %v808 = vmul.f32 %v792, 0.118318014
  %v809 = vmul.f32 %v793, 0.118318014
  %v810 = vmul.f32 %v794, 0.118318014
  %v811 = vmul.f32 %v795, 0.118318014
  %v812 = vmul.f32 %v796, 0.118318014
  %v813 = vmul.f32 %v797, 0.118318014
  %v814 = vadd.f32 %v715, %v798
  %v815 = vadd.f32 %v716, %v799
  %v816 = vadd.f32 %v717, %v800
  %v817 = vadd.f32 %v718, %v801
  %v818 = vadd.f32 %v719, %v802
  %v819 = vadd.f32 %v720, %v803
  %v820 = vadd.f32 %v721, %v804
  %v821 = vadd.f32 %v722, %v805
  %v822 = vadd.f32 %v723, %v806
  %v823 = vadd.f32 %v724, %v807
  %v824 = vadd.f32 %v725, %v808
  %v825 = vadd.f32 %v726, %v809
  %v826 = vadd.f32 %v727, %v810
  %v827 = vadd.f32 %v728, %v811
  %v828 = vadd.f32 %v729, %v812
  %v829 = vadd.f32 %v730, %v813
  %v830 = vmul.f32 %v798, %v781
  %v831 = vmul.f32 %v799, %v782
  %v832 = vmul.f32 %v800, %v783
  %v833 = vmul.f32 %v801, %v784
  %v834 = vmul.f32 %v802, %v785
  %v835 = vmul.f32 %v803, %v786
  %v836 = vmul.f32 %v804, %v787
  %v837 = vmul.f32 %v805, %v788
  %v838 = vadd.f32 %v739, %v830
  %v839 = vadd.f32 %v740, %v831
  %v840 = vadd.f32 %v741, %v832
  %v841 = vadd.f32 %v742, %v833
  %v842 = vadd.f32 %v743, %v834
  %v843 = vadd.f32 %v744, %v835
  %v844 = vadd.f32 %v745, %v836
  %v845 = vadd.f32 %v746, %v837
  %v846 = vmul.f32 %v806, %v790
  %v847 = vmul.f32 %v807, %v791
  %v848 = vmul.f32 %v808, %v792
  %v849 = vmul.f32 %v809, %v793
  %v850 = vmul.f32 %v810, %v794
  %v851 = vmul.f32 %v811, %v795
  %v852 = vmul.f32 %v812, %v796
  %v853 = vmul.f32 %v813, %v797
  %v854 = vadd.f32 %v755, %v846
  %v855 = vadd.f32 %v756, %v847
  %v856 = vadd.f32 %v757, %v848
  %v857 = vadd.f32 %v758, %v849
  %v858 = vadd.f32 %v759, %v850
  %v859 = vadd.f32 %v760, %v851
  %v860 = vadd.f32 %v761, %v852
  %v861 = vadd.f32 %v762, %v853
  %v862 = vmul.f32 %v798, %v790
  %v863 = vmul.f32 %v799, %v791
  %v864 = vmul.f32 %v800, %v792
  %v865 = vmul.f32 %v801, %v793
  %v866 = vmul.f32 %v802, %v794
  %v867 = vmul.f32 %v803, %v795
  %v868 = vmul.f32 %v804, %v796
  %v869 = vmul.f32 %v805, %v797
  %v870 = vadd.f32 %v771, %v862
  %v871 = vadd.f32 %v772, %v863
  %v872 = vadd.f32 %v773, %v864
  %v873 = vadd.f32 %v774, %v865
  %v874 = vadd.f32 %v775, %v866
  %v875 = vadd.f32 %v776, %v867
  %v876 = vadd.f32 %v777, %v868
  %v877 = vadd.f32 %v778, %v869
  %s878 = sadd.s32 0, 512
  %s879 = scalar_lea.vmem %s44, %s878
  %v880 = vld [vmem:[%s879] sm:$0xff]
  %v881 = vld [vmem:[%s879 + $0x8] sm:$0xff]
  %v882 = vld [vmem:[%s879 + $0x10] sm:$0xff]
  %v883 = vld [vmem:[%s879 + $0x18] sm:$0xff]
  %v884 = vld [vmem:[%s879 + $0x20] sm:$0xff]
  %v885 = vld [vmem:[%s879 + $0x28] sm:$0xff]
  %v886 = vld [vmem:[%s879 + $0x30] sm:$0xff]
  %v887 = vld [vmem:[%s879 + $0x38] sm:$0xff]
  %s888 = scalar_lea.vmem %s52, %s878
  %v889 = vld [vmem:[%s888] sm:$0xff]
  %v890 = vld [vmem:[%s888 + $0x8] sm:$0xff]
  %v891 = vld [vmem:[%s888 + $0x10] sm:$0xff]
  %v892 = vld [vmem:[%s888 + $0x18] sm:$0xff]
  %v893 = vld [vmem:[%s888 + $0x20] sm:$0xff]
  %v894 = vld [vmem:[%s888 + $0x28] sm:$0xff]
  %v895 = vld [vmem:[%s888 + $0x30] sm:$0xff]
  %v896 = vld [vmem:[%s888 + $0x38] sm:$0xff]
  %v897 = vmul.f32 %v880, 0.09474166
  %v898 = vmul.f32 %v881, 0.09474166
  %v899 = vmul.f32 %v882, 0.09474166
  %v900 = vmul.f32 %v883, 0.09474166
  %v901 = vmul.f32 %v884, 0.09474166
  %v902 = vmul.f32 %v885, 0.09474166
  %v903 = vmul.f32 %v886, 0.09474166
  %v904 = vmul.f32 %v887, 0.09474166
  %v905 = vmul.f32 %v889, 0.09474166
  %v906 = vmul.f32 %v890, 0.09474166
  %v907 = vmul.f32 %v891, 0.09474166
  %v908 = vmul.f32 %v892, 0.09474166
  %v909 = vmul.f32 %v893, 0.09474166
  %v910 = vmul.f32 %v894, 0.09474166
  %v911 = vmul.f32 %v895, 0.09474166
  %v912 = vmul.f32 %v896, 0.09474166
  %v913 = vadd.f32 %v814, %v897
  %v914 = vadd.f32 %v815, %v898
  %v915 = vadd.f32 %v816, %v899
  %v916 = vadd.f32 %v817, %v900
  %v917 = vadd.f32 %v818, %v901
  %v918 = vadd.f32 %v819, %v902
  %v919 = vadd.f32 %v820, %v903
  %v920 = vadd.f32 %v821, %v904
  %v921 = vadd.f32 %v822, %v905
  %v922 = vadd.f32 %v823, %v906
  %v923 = vadd.f32 %v824, %v907
  %v924 = vadd.f32 %v825, %v908
  %v925 = vadd.f32 %v826, %v909
  %v926 = vadd.f32 %v827, %v910
  %v927 = vadd.f32 %v828, %v911
  %v928 = vadd.f32 %v829, %v912
  %v929 = vmul.f32 %v897, %v880
  %v930 = vmul.f32 %v898, %v881
  %v931 = vmul.f32 %v899, %v882
  %v932 = vmul.f32 %v900, %v883
  %v933 = vmul.f32 %v901, %v884
  %v934 = vmul.f32 %v902, %v885
  %v935 = vmul.f32 %v903, %v886
  %v936 = vmul.f32 %v904, %v887
  %v937 = vadd.f32 %v838, %v929
  %v938 = vadd.f32 %v839, %v930
  %v939 = vadd.f32 %v840, %v931
  %v940 = vadd.f32 %v841, %v932
  %v941 = vadd.f32 %v842, %v933
  %v942 = vadd.f32 %v843, %v934
  %v943 = vadd.f32 %v844, %v935
  %v944 = vadd.f32 %v845, %v936
  %v945 = vmul.f32 %v905, %v889
  %v946 = vmul.f32 %v906, %v890
  %v947 = vmul.f32 %v907, %v891
  %v948 = vmul.f32 %v908, %v892
  %v949 = vmul.f32 %v909, %v893
  %v950 = vmul.f32 %v910, %v894
  %v951 = vmul.f32 %v911, %v895
  %v952 = vmul.f32 %v912, %v896
  %v953 = vadd.f32 %v854, %v945
  %v954 = vadd.f32 %v855, %v946
  %v955 = vadd.f32 %v856, %v947
  %v956 = vadd.f32 %v857, %v948
  %v957 = vadd.f32 %v858, %v949
  %v958 = vadd.f32 %v859, %v950
  %v959 = vadd.f32 %v860, %v951
  %v960 = vadd.f32 %v861, %v952
  %v961 = vmul.f32 %v897, %v889
  %v962 = vmul.f32 %v898, %v890
  %v963 = vmul.f32 %v899, %v891
  %v964 = vmul.f32 %v900, %v892
  %v965 = vmul.f32 %v901, %v893
  %v966 = vmul.f32 %v902, %v894
  %v967 = vmul.f32 %v903, %v895
  %v968 = vmul.f32 %v904, %v896
  %v969 = vadd.f32 %v870, %v961
  %v970 = vadd.f32 %v871, %v962
  %v971 = vadd.f32 %v872, %v963
  %v972 = vadd.f32 %v873, %v964
  %v973 = vadd.f32 %v874, %v965
  %v974 = vadd.f32 %v875, %v966
  %v975 = vadd.f32 %v876, %v967
  %v976 = vadd.f32 %v877, %v968
  %v977 = vmul.f32 %v913, %v913
  %v978 = vmul.f32 %v914, %v914
  %v979 = vmul.f32 %v915, %v915
  %v980 = vmul.f32 %v916, %v916
  %v981 = vmul.f32 %v917, %v917
  %v982 = vmul.f32 %v918, %v918
  %v983 = vmul.f32 %v919, %v919
  %v984 = vmul.f32 %v920, %v920
  %v985 = vmul.f32 %v921, %v921
  %v986 = vmul.f32 %v922, %v922
  %v987 = vmul.f32 %v923, %v923
  %v988 = vmul.f32 %v924, %v924
  %v989 = vmul.f32 %v925, %v925
  %v990 = vmul.f32 %v926, %v926
  %v991 = vmul.f32 %v927, %v927
  %v992 = vmul.f32 %v928, %v928
  %v993 = vmul.f32 %v913, %v921
  %v994 = vmul.f32 %v914, %v922
  %v995 = vmul.f32 %v915, %v923
  %v996 = vmul.f32 %v916, %v924
  %v997 = vmul.f32 %v917, %v925
  %v998 = vmul.f32 %v918, %v926
  %v999 = vmul.f32 %v919, %v927
  %v1000 = vmul.f32 %v920, %v928
  %v1001 = vsub.f32 %v937, %v977
  %v1002 = vsub.f32 %v938, %v978
  %v1003 = vsub.f32 %v939, %v979
  %v1004 = vsub.f32 %v940, %v980
  %v1005 = vsub.f32 %v941, %v981
  %v1006 = vsub.f32 %v942, %v982
  %v1007 = vsub.f32 %v943, %v983
  %v1008 = vsub.f32 %v944, %v984
  %v1009 = vsub.f32 %v953, %v985
  %v1010 = vsub.f32 %v954, %v986
  %v1011 = vsub.f32 %v955, %v987
  %v1012 = vsub.f32 %v956, %v988
  %v1013 = vsub.f32 %v957, %v989
  %v1014 = vsub.f32 %v958, %v990
  %v1015 = vsub.f32 %v959, %v991
  %v1016 = vsub.f32 %v960, %v992
  %v1017 = vsub.f32 %v969, %v993
  %v1018 = vsub.f32 %v970, %v994
  %v1019 = vsub.f32 %v971, %v995
  %v1020 = vsub.f32 %v972, %v996
  %v1021 = vsub.f32 %v973, %v997
  %v1022 = vsub.f32 %v974, %v998
  %v1023 = vsub.f32 %v975, %v999
  %v1024 = vsub.f32 %v976, %v1000
  %v1025 = vmul.f32 %v993, 2.0
  %v1026 = vmul.f32 %v994, 2.0
  %v1027 = vmul.f32 %v995, 2.0
  %v1028 = vmul.f32 %v996, 2.0
  %v1029 = vmul.f32 %v997, 2.0
  %v1030 = vmul.f32 %v998, 2.0
  %v1031 = vmul.f32 %v999, 2.0
  %v1032 = vmul.f32 %v1000, 2.0
  %v1033 = vadd.f32 %v1025, 0.0001
  %v1034 = vadd.f32 %v1026, 0.0001
  %v1035 = vadd.f32 %v1027, 0.0001
  %v1036 = vadd.f32 %v1028, 0.0001
  %v1037 = vadd.f32 %v1029, 0.0001
  %v1038 = vadd.f32 %v1030, 0.0001
  %v1039 = vadd.f32 %v1031, 0.0001
  %v1040 = vadd.f32 %v1032, 0.0001
  %v1041 = vmul.f32 %v1017, 2.0
  %v1042 = vmul.f32 %v1018, 2.0
  %v1043 = vmul.f32 %v1019, 2.0
  %v1044 = vmul.f32 %v1020, 2.0
  %v1045 = vmul.f32 %v1021, 2.0
  %v1046 = vmul.f32 %v1022, 2.0
  %v1047 = vmul.f32 %v1023, 2.0
  %v1048 = vmul.f32 %v1024, 2.0
  %v1049 = vadd.f32 %v1041, 0.0009
  %v1050 = vadd.f32 %v1042, 0.0009
  %v1051 = vadd.f32 %v1043, 0.0009
  %v1052 = vadd.f32 %v1044, 0.0009
  %v1053 = vadd.f32 %v1045, 0.0009
  %v1054 = vadd.f32 %v1046, 0.0009
  %v1055 = vadd.f32 %v1047, 0.0009
  %v1056 = vadd.f32 %v1048, 0.0009
  %v1057 = vmul.f32 %v1033, %v1049
  %v1058 = vmul.f32 %v1034, %v1050
  %v1059 = vmul.f32 %v1035, %v1051
  %v1060 = vmul.f32 %v1036, %v1052
  %v1061 = vmul.f32 %v1037, %v1053
  %v1062 = vmul.f32 %v1038, %v1054
  %v1063 = vmul.f32 %v1039, %v1055
  %v1064 = vmul.f32 %v1040, %v1056
  %v1065 = vadd.f32 %v977, %v985
  %v1066 = vadd.f32 %v978, %v986
  %v1067 = vadd.f32 %v979, %v987
  %v1068 = vadd.f32 %v980, %v988
  %v1069 = vadd.f32 %v981, %v989
  %v1070 = vadd.f32 %v982, %v990
  %v1071 = vadd.f32 %v983, %v991
  %v1072 = vadd.f32 %v984, %v992
  %v1073 = vadd.f32 %v1065, 0.0001
  %v1074 = vadd.f32 %v1066, 0.0001
  %v1075 = vadd.f32 %v1067, 0.0001
  %v1076 = vadd.f32 %v1068, 0.0001
  %v1077 = vadd.f32 %v1069, 0.0001
  %v1078 = vadd.f32 %v1070, 0.0001
  %v1079 = vadd.f32 %v1071, 0.0001
  %v1080 = vadd.f32 %v1072, 0.0001
  %v1081 = vadd.f32 %v1001, %v1009
  %v1082 = vadd.f32 %v1002, %v1010
  %v1083 = vadd.f32 %v1003, %v1011
  %v1084 = vadd.f32 %v1004, %v1012
  %v1085 = vadd.f32 %v1005, %v1013
  %v1086 = vadd.f32 %v1006, %v1014
  %v1087 = vadd.f32 %v1007, %v1015
  %v1088 = vadd.f32 %v1008, %v1016
  %v1089 = vadd.f32 %v1081, 0.0009
  %v1090 = vadd.f32 %v1082, 0.0009
  %v1091 = vadd.f32 %v1083, 0.0009
  %v1092 = vadd.f32 %v1084, 0.0009
  %v1093 = vadd.f32 %v1085, 0.0009
  %v1094 = vadd.f32 %v1086, 0.0009
  %v1095 = vadd.f32 %v1087, 0.0009
  %v1096 = vadd.f32 %v1088, 0.0009
  %v1097 = vmul.f32 %v1073, %v1089
  %v1098 = vmul.f32 %v1074, %v1090
  %v1099 = vmul.f32 %v1075, %v1091
  %v1100 = vmul.f32 %v1076, %v1092
  %v1101 = vmul.f32 %v1077, %v1093
  %v1102 = vmul.f32 %v1078, %v1094
  %v1103 = vmul.f32 %v1079, %v1095
  %v1104 = vmul.f32 %v1080, %v1096
  %v1105 = vrcp.pop %v1097
  %v1106 = vrcp.pop %v1098
  %v1107 = vrcp.pop %v1099
  %v1108 = vrcp.pop %v1100
  %v1109 = vrcp.pop %v1101
  %v1110 = vrcp.pop %v1102
  %v1111 = vrcp.pop %v1103
  %v1112 = vrcp.pop %v1104
  %v1113 = vmul.f32 %v1097, %v1105
  %v1114 = vmul.f32 %v1098, %v1106
  %v1115 = vmul.f32 %v1099, %v1107
  %v1116 = vmul.f32 %v1100, %v1108
  %v1117 = vmul.f32 %v1101, %v1109
  %v1118 = vmul.f32 %v1102, %v1110
  %v1119 = vmul.f32 %v1103, %v1111
  %v1120 = vmul.f32 %v1104, %v1112
  %v1121 = vsub.f32 2.0, %v1113
  %v1122 = vsub.f32 2.0, %v1114
  %v1123 = vsub.f32 2.0, %v1115
  %v1124 = vsub.f32 2.0, %v1116
  %v1125 = vsub.f32 2.0, %v1117
  %v1126 = vsub.f32 2.0, %v1118
  %v1127 = vsub.f32 2.0, %v1119
  %v1128 = vsub.f32 2.0, %v1120
  %v1129 = vmul.f32 %v1105, %v1121
  %v1130 = vmul.f32 %v1106, %v1122
  %v1131 = vmul.f32 %v1107, %v1123
  %v1132 = vmul.f32 %v1108, %v1124
  %v1133 = vmul.f32 %v1109, %v1125
  %v1134 = vmul.f32 %v1110, %v1126
  %v1135 = vmul.f32 %v1111, %v1127
  %v1136 = vmul.f32 %v1112, %v1128
  %v1137 = vmul.f32 %v1057, %v1129
  %v1138 = vmul.f32 %v1058, %v1130
  %v1139 = vmul.f32 %v1059, %v1131
  %v1140 = vmul.f32 %v1060, %v1132
  %v1141 = vmul.f32 %v1061, %v1133
  %v1142 = vmul.f32 %v1062, %v1134
  %v1143 = vmul.f32 %v1063, %v1135
  %v1144 = vmul.f32 %v1064, %v1136
  %s1145 = smul.u32 0, 128
  %s1146 = sadd.s32 %s61, %s1145
  %s1147 = ssub.s32 216, %s1146
  %v1148 = vstv %s1147
  %vm1149 = vcmp.lt.s32.totalorder %v81, %v1148
  %vm1150 = vcmp.lt.s32.totalorder %v82, %v1148
  %vm1151 = vcmp.lt.s32.totalorder %v83, %v1148
  %vm1152 = vcmp.lt.s32.totalorder %v84, %v1148
  %vm1153 = vcmp.lt.s32.totalorder %v85, %v1148
  %vm1154 = vcmp.lt.s32.totalorder %v86, %v1148
  %vm1155 = vcmp.lt.s32.totalorder %v87, %v1148
  %vm1156 = vcmp.lt.s32.totalorder %v88, %v1148
  %v1157 = vsel %vm1149, %v1137, 0.0
  %v1158 = vsel %vm1150, %v1138, 0.0
  %v1159 = vsel %vm1151, %v1139, 0.0
  %v1160 = vsel %vm1152, %v1140, 0.0
  %v1161 = vsel %vm1153, %v1141, 0.0
  %v1162 = vsel %vm1154, %v1142, 0.0
  %v1163 = vsel %vm1155, %v1143, 0.0
  %v1164 = vsel %vm1156, %v1144, 0.0
  %v1165 = vadd.f32 %v1157, %v1158
  %v1166 = vadd.f32 %v1165, %v1159
  %v1167 = vadd.f32 %v1166, %v1160
  %v1168 = vadd.f32 %v1167, %v1161
  %v1169 = vadd.f32 %v1168, %v1162
  %v1170 = vadd.f32 %v1169, %v1163
  %v1171 = vadd.f32 %v1170, %v1164
  %v1172 = vadd.f32 %v1171, 0.0
  %v1173 = vld [vmem:[%s2] sm:$0xff]
  %v1174 = vadd.f32 %v1173, %v1172
  %1175 = vst [vmem:[%s2] sm:$0xff] %v1174
  // Predicated region
  $region14: #{ssim_pallas.1} parent=0 // pred_check
    _
  $region15: #{ssim_pallas.1} parent=0 // pred_check_branch
    %1177 = sbr.rel (0) target = $region17
  $region16: #{ssim_pallas.1} parent=0 // pred_region
    _
  $region17: #{ssim_pallas.1} parent=0 // pred_fallthru
    _
  // Predicated region
  $region18: #{ssim_pallas.1} parent=0 // pred_check
    _
  $region19: #{ssim_pallas.1} parent=0 // pred_check_branch
    %1179 = sbr.rel (0) target = $region21
  $region20: #{ssim_pallas.1} parent=0 // pred_region
    _
  $region21: #{ssim_pallas.1} parent=0 // pred_fallthru
    _

</llo_original>
